<compile_context>
chip_gen: v7x
topology: tpu7x:2x2x1
jax: 0.10.0
libtpu: 0.0.40
codegen_flags: <defaults>
</compile_context>

<pallas_src>
import functools

import jax
import jax.numpy as jnp
import numpy as np
from jax.experimental import pallas as pl
from jax.experimental.pallas import tpu as pltpu


# ----------------------------- kernel ---------------------------------------
def _layer_norm(x, w, b, eps=1e-5):
    mu = jnp.mean(x, axis=-1, keepdims=True)
    var = jnp.mean(jnp.square(x - mu), axis=-1, keepdims=True)
    return (x - mu) * jax.lax.rsqrt(var + eps) * w + b


def encoder_stack_kernel(x_ref,
                         wq_ref, wk_ref, wv_ref, bq_ref, bk_ref, bv_ref,
                         wo_ref, bo_ref, ln1w_ref, ln1b_ref,
                         w1_ref, b1_ref, w2_ref, b2_ref, ln2w_ref, ln2b_ref,
                         o_ref, x_vmem, *, num_heads):
    layer = pl.program_id(1)
    num_layers = pl.num_programs(1)

    # Load the batch tile from HBM once (layer 0); afterwards the activation
    # lives in the VMEM scratch across all layer iterations.
    @pl.when(layer == 0)
    def _():
        x_vmem[...] = x_ref[...].astype(jnp.float32)

    x = x_vmem[...]                                   # (Bt, S, D) f32
    Bt, S, D = x.shape
    H = num_heads
    dh = D // H
    scale = 1.0 / float(np.sqrt(dh))

    xb = x.astype(jnp.bfloat16)

    # ---- multi-head self-attention (head-major, no lane slicing) -----------
    # Combine (batch, head) into one leading batch axis for batched MXU matmuls.
    x_bh = jnp.broadcast_to(xb[:, None], (Bt, H, S, D)).reshape(Bt * H, S, D)

    def head_proj(w_ref, b_ref):
        w = jnp.broadcast_to(w_ref[...][None], (Bt, H, D, dh)).reshape(Bt * H, D, dh)
        b = jnp.broadcast_to(b_ref[...][None], (Bt, H, 1, dh)).reshape(Bt * H, 1, dh)
        y = jnp.einsum('bsd,bdc->bsc', x_bh, w,
                       preferred_element_type=jnp.float32)
        return y + b                                  # (Bt*H, S, dh) f32

    q = head_proj(wq_ref, bq_ref)
    k = head_proj(wk_ref, bk_ref)
    v = head_proj(wv_ref, bv_ref)

    s = jnp.einsum('bqc,bkc->bqk', q.astype(jnp.bfloat16), k.astype(jnp.bfloat16),
                   preferred_element_type=jnp.float32) * scale
    s = s - jnp.max(s, axis=-1, keepdims=True)        # f32 softmax math
    p = jnp.exp(s)
    p = p * pl.reciprocal(jnp.sum(p, axis=-1, keepdims=True), approx=True)

    ctx = jnp.einsum('bqk,bkc->bqc', p.astype(jnp.bfloat16), v.astype(jnp.bfloat16),
                     preferred_element_type=jnp.float32)   # (Bt*H, S, dh)

    # Per-head output projection, reduced over heads (fold of the concat+proj).
    wo = jnp.broadcast_to(wo_ref[...][None], (Bt, H, dh, D)).reshape(Bt * H, dh, D)
    attn = jnp.einsum('bqc,bcd->bqd', ctx.astype(jnp.bfloat16), wo,
                      preferred_element_type=jnp.float32)  # (Bt*H, S, D)
    attn = jnp.sum(attn.reshape(Bt, H, S, D), axis=1) + bo_ref[...]

    # residual + LayerNorm (post-norm) on a flattened lane-dense slab.
    xf = x.reshape(Bt * S, D) + attn.reshape(Bt * S, D)
    xf = _layer_norm(xf, ln1w_ref[...], ln1b_ref[...])

    # ---- feed-forward (SiLU) -------------------------------------------------
    h1 = jnp.einsum('nd,df->nf', xf.astype(jnp.bfloat16), w1_ref[...],
                    preferred_element_type=jnp.float32) + b1_ref[...]
    h1 = h1 * jax.nn.sigmoid(h1)                      # SiLU, f32
    ff = jnp.einsum('nf,fd->nd', h1.astype(jnp.bfloat16), w2_ref[...],
                    preferred_element_type=jnp.float32) + b2_ref[...]

    xf = _layer_norm(xf + ff, ln2w_ref[...], ln2b_ref[...])

    x_vmem[...] = xf.reshape(Bt, S, D)                # carry to next layer

    @pl.when(layer == num_layers - 1)
    def _():
        o_ref[...] = xf.reshape(Bt, S, D).astype(o_ref.dtype)


# ----------------------------- wrapper ---------------------------------------
def self_attention_pallas(x, packed, num_heads, *, block_b=1):
    B, S, D = x.shape
    H = num_heads
    dh = D // H
    L = packed['wq'].shape[0]
    F = packed['w1'].shape[-1]
    assert B % block_b == 0 and D % H == 0

    grid = (B // block_b, L)                          # layer axis innermost

    def xmap(b, l):
        return (b, 0, 0)

    def w4map(b, l):
        return (l, 0, 0, 0)

    def w3map(b, l):
        return (l, 0, 0)

    in_specs = [
        pl.BlockSpec((block_b, S, D), xmap),          # x
        pl.BlockSpec((None, H, D, dh), w4map),        # wq
        pl.BlockSpec((None, H, D, dh), w4map),        # wk
        pl.BlockSpec((None, H, D, dh), w4map),        # wv
        pl.BlockSpec((None, H, 1, dh), w4map),        # bq
        pl.BlockSpec((None, H, 1, dh), w4map),        # bk
        pl.BlockSpec((None, H, 1, dh), w4map),        # bv
        pl.BlockSpec((None, H, dh, D), w4map),        # wo
        pl.BlockSpec((None, 1, D), w3map),            # bo
        pl.BlockSpec((None, 1, D), w3map),            # ln1w
        pl.BlockSpec((None, 1, D), w3map),            # ln1b
        pl.BlockSpec((None, D, F), w3map),            # w1
        pl.BlockSpec((None, 1, F), w3map),            # b1
        pl.BlockSpec((None, F, D), w3map),            # w2
        pl.BlockSpec((None, 1, D), w3map),            # b2
        pl.BlockSpec((None, 1, D), w3map),            # ln2w
        pl.BlockSpec((None, 1, D), w3map),            # ln2b
    ]
    out_spec = pl.BlockSpec((block_b, S, D), xmap)

    kern = functools.partial(encoder_stack_kernel, num_heads=num_heads)
    return pl.pallas_call(
        kern,
        out_shape=jax.ShapeDtypeStruct((B, S, D), x.dtype),
        grid_spec=pltpu.PrefetchScalarGridSpec(
            num_scalar_prefetch=0,
            grid=grid,
            in_specs=in_specs,
            out_specs=out_spec,
            scratch_shapes=[pltpu.VMEM((block_b, S, D), jnp.float32)]),
        compiler_params=pltpu.CompilerParams(
            dimension_semantics=("parallel", "arbitrary"),
            vmem_limit_bytes=32 * 1024 * 1024),
    )(x, packed['wq'], packed['wk'], packed['wv'],
      packed['bq'], packed['bk'], packed['bv'],
      packed['wo'], packed['bo'], packed['ln1w'], packed['ln1b'],
      packed['w1'], packed['b1'], packed['w2'], packed['b2'],
      packed['ln2w'], packed['ln2b'])


# ------------------- host-side weight repacking (PyTorch -> kernel) ----------
def pack_params(layer_params, num_heads):
    H = num_heads
    D = layer_params[0]['wo'].shape[0]
    dh = D // H

    def stack(fn, dtype):
        return jnp.stack([fn(p) for p in layer_params]).astype(dtype)

    def split_heads_w(w):        # (D_out, D_in) -> (H, D_in, dh)
        return w.T.reshape(D, H, dh).transpose(1, 0, 2)

    return {
        'wq': stack(lambda p: split_heads_w(p['wqkv'][:D]), jnp.bfloat16),
        'wk': stack(lambda p: split_heads_w(p['wqkv'][D:2 * D]), jnp.bfloat16),
        'wv': stack(lambda p: split_heads_w(p['wqkv'][2 * D:]), jnp.bfloat16),
        'bq': stack(lambda p: p['bqkv'][0, :D].reshape(H, 1, dh), jnp.float32),
        'bk': stack(lambda p: p['bqkv'][0, D:2 * D].reshape(H, 1, dh), jnp.float32),
        'bv': stack(lambda p: p['bqkv'][0, 2 * D:].reshape(H, 1, dh), jnp.float32),
        'wo': stack(lambda p: p['wo'].T.reshape(H, dh, D), jnp.bfloat16),
        'bo': stack(lambda p: p['bo'], jnp.float32),
        'ln1w': stack(lambda p: p['ln1w'], jnp.float32),
        'ln1b': stack(lambda p: p['ln1b'], jnp.float32),
        'w1': stack(lambda p: p['w1'].T, jnp.bfloat16),     # (L, D, F)
        'b1': stack(lambda p: p['b1'], jnp.float32),        # (L, 1, F)
        'w2': stack(lambda p: p['w2'].T, jnp.bfloat16),     # (L, F, D)
        'b2': stack(lambda p: p['b2'], jnp.float32),
        'ln2w': stack(lambda p: p['ln2w'], jnp.float32),
        'ln2b': stack(lambda p: p['ln2b'], jnp.float32),
    }


# ----------------------------- pure-JAX reference -----------------------------
def transformer_encoder_ref(x, layer_params, num_heads):
    x = x.astype(jnp.float32)
    B, S, D = x.shape
    dh = D // num_heads
    for p in layer_params:
        qkv = x @ p['wqkv'].T + p['bqkv'][0]
        q, k, v = qkv[..., :D], qkv[..., D:2 * D], qkv[..., 2 * D:]
        q = q.reshape(B, S, num_heads, dh).transpose(0, 2, 1, 3)
        k = k.reshape(B, S, num_heads, dh).transpose(0, 2, 1, 3)
        v = v.reshape(B, S, num_heads, dh).transpose(0, 2, 1, 3)
        s = jnp.einsum('bhqd,bhkd->bhqk', q, k) / np.sqrt(dh)
        pr = jax.nn.softmax(s, axis=-1)
        a = jnp.einsum('bhqk,bhkd->bhqd', pr, v)
        a = a.transpose(0, 2, 1, 3).reshape(B, S, D)
        a = a @ p['wo'].T + p['bo'][0]
        x = x + a
        mu = x.mean(-1, keepdims=True)
        var = ((x - mu) ** 2).mean(-1, keepdims=True)
        x = (x - mu) / jnp.sqrt(var + 1e-5) * p['ln1w'][0] + p['ln1b'][0]
        h = x @ p['w1'].T + p['b1'][0]
        h = h * jax.nn.sigmoid(h)
        f = h @ p['w2'].T + p['b2'][0]
        x = x + f
        mu = x.mean(-1, keepdims=True)
        var = ((x - mu) ** 2).mean(-1, keepdims=True)
        x = (x - mu) / jnp.sqrt(var + 1e-5) * p['ln2w'][0] + p['ln2b'][0]
    return x


# ----------------------------- parameter init ---------------------------------
def init_params(key, num_layers, d_model, d_ff):
    params = []
    for _ in range(num_layers):
        keys = jax.random.split(key, 8)
        key = keys[0]
        s_d = 1.0 / np.sqrt(d_model)
        s_f = 1.0 / np.sqrt(d_ff)
        p = {
            'wqkv': jax.random.normal(keys[1], (3 * d_model, d_model), jnp.float32) * s_d,
            'bqkv': jax.random.normal(keys[2], (1, 3 * d_model), jnp.float32) * 0.02,
            'wo':   jax.random.normal(keys[3], (d_model, d_model), jnp.float32) * s_d,
            'bo':   jax.random.normal(keys[4], (1, d_model), jnp.float32) * 0.02,
            'ln1w': jnp.ones((1, d_model), jnp.float32),
            'ln1b': jnp.zeros((1, d_model), jnp.float32),
            'w1':   jax.random.normal(keys[5], (d_ff, d_model), jnp.float32) * s_d,
            'b1':   jax.random.normal(keys[6], (1, d_ff), jnp.float32) * 0.02,
            'w2':   jax.random.normal(keys[7], (d_model, d_ff), jnp.float32) * s_f,
            'b2':   jnp.zeros((1, d_model), jnp.float32),
            'ln2w': jnp.ones((1, d_model), jnp.float32),
            'ln2b': jnp.zeros((1, d_model), jnp.float32),
        }
        params.append(p)
    return params


# ----------------------------- main -------------------------------------------
if __name__ == "__main__":
    # Small, consistent instantiation of SelfAttention(width=0.125, depth=0.25):
    #   d_model = round(512*0.125) = 64, nhead = round(16*0.125) = 2,
    #   dim_feedforward = round(2*512*0.125) = 128, num_layers = round(8*0.25) = 2.
    d_model, num_heads, d_ff, num_layers = 64, 2, 128, 2
    batch, seq = 2, 8

    key = jax.random.PRNGKey(0)
    k_x, k_p = jax.random.split(key)
    x = jax.random.normal(k_x, (batch, seq, d_model), jnp.float32)
    params = init_params(k_p, num_layers, d_model, d_ff)
    packed = pack_params(params, num_heads)

    out = self_attention_pallas(x, packed, num_heads, block_b=1)
    out = jax.block_until_ready(out)

    ref = transformer_encoder_ref(x, params, num_heads)
    # Kernel matmuls run in bf16 (f32 accumulate); compare with bf16-level tolerance.
    np.testing.assert_allclose(np.asarray(out), np.asarray(ref),
                               rtol=5e-2, atol=5e-2)

    print("KERNEL_OK")
</pallas_src>

<mosaic_0001>
module attributes {stable_mosaic.version = 11 : i64} {
  func.func @encoder_stack_kernel(%arg0: i32, %arg1: i32, %arg2: memref<1x8x64xf32, #tpu.memory_space<vmem>>, %arg3: memref<1x2x64x32xbf16, #tpu.memory_space<vmem>>, %arg4: memref<1x2x64x32xbf16, #tpu.memory_space<vmem>>, %arg5: memref<1x2x64x32xbf16, #tpu.memory_space<vmem>>, %arg6: memref<1x2x1x32xf32, #tpu.memory_space<vmem>>, %arg7: memref<1x2x1x32xf32, #tpu.memory_space<vmem>>, %arg8: memref<1x2x1x32xf32, #tpu.memory_space<vmem>>, %arg9: memref<1x2x32x64xbf16, #tpu.memory_space<vmem>>, %arg10: memref<1x1x64xf32, #tpu.memory_space<vmem>>, %arg11: memref<1x1x64xf32, #tpu.memory_space<vmem>>, %arg12: memref<1x1x64xf32, #tpu.memory_space<vmem>>, %arg13: memref<1x64x128xbf16, #tpu.memory_space<vmem>>, %arg14: memref<1x1x128xf32, #tpu.memory_space<vmem>>, %arg15: memref<1x128x64xbf16, #tpu.memory_space<vmem>>, %arg16: memref<1x1x64xf32, #tpu.memory_space<vmem>>, %arg17: memref<1x1x64xf32, #tpu.memory_space<vmem>>, %arg18: memref<1x1x64xf32, #tpu.memory_space<vmem>>, %arg19: memref<1x8x64xf32, #tpu.memory_space<vmem>>, %arg20: memref<1x8x64xf32, #tpu.memory_space<vmem>>) attributes {dimension_semantics = [#tpu.dimension_semantics<parallel>, #tpu.dimension_semantics<arbitrary>], iteration_bounds = array<i64: 2, 2>, scalar_prefetch = 0 : i64, scratch_operands = 1 : i64, tpu.core_type = #tpu.core_type<tc>, window_params = [{transform_indices = @transform_0, window_bounds = array<i64: 1, 8, 64>}, {transform_indices = @transform_1, window_bounds = array<i64: 1, 2, 64, 32>}, {transform_indices = @transform_2, window_bounds = array<i64: 1, 2, 64, 32>}, {transform_indices = @transform_3, window_bounds = array<i64: 1, 2, 64, 32>}, {transform_indices = @transform_4, window_bounds = array<i64: 1, 2, 1, 32>}, {transform_indices = @transform_5, window_bounds = array<i64: 1, 2, 1, 32>}, {transform_indices = @transform_6, window_bounds = array<i64: 1, 2, 1, 32>}, {transform_indices = @transform_7, window_bounds = array<i64: 1, 2, 32, 64>}, {transform_indices = @transform_8, window_bounds = array<i64: 1, 1, 64>}, {transform_indices = @transform_9, window_bounds = array<i64: 1, 1, 64>}, {transform_indices = @transform_10, window_bounds = array<i64: 1, 1, 64>}, {transform_indices = @transform_11, window_bounds = array<i64: 1, 64, 128>}, {transform_indices = @transform_12, window_bounds = array<i64: 1, 1, 128>}, {transform_indices = @transform_13, window_bounds = array<i64: 1, 128, 64>}, {transform_indices = @transform_14, window_bounds = array<i64: 1, 1, 64>}, {transform_indices = @transform_15, window_bounds = array<i64: 1, 1, 64>}, {transform_indices = @transform_16, window_bounds = array<i64: 1, 1, 64>}, {transform_indices = @transform_17, window_bounds = array<i64: 1, 8, 64>}]} {
    %c0_i32 = arith.constant 0 : i32
    %0 = arith.cmpi eq, %arg1, %c0_i32 : i32
    %1 = arith.extui %0 : i1 to i32
    %c0_i32_0 = arith.constant 0 : i32
    %2 = arith.cmpi ne, %1, %c0_i32_0 : i32
    scf.if %2 {
      %c0_84 = arith.constant 0 : index
      %c0_85 = arith.constant 0 : index
      %c0_86 = arith.constant 0 : index
      %156 = vector.load %arg2[%c0_84, %c0_85, %c0_86] : memref<1x8x64xf32, #tpu.memory_space<vmem>>, vector<1x8x64xf32>
      %c0_87 = arith.constant 0 : index
      %c0_88 = arith.constant 0 : index
      %c0_89 = arith.constant 0 : index
      %157 = vector.load %arg20[%c0_87, %c0_88, %c0_89] : memref<1x8x64xf32, #tpu.memory_space<vmem>>, vector<1x8x64xf32>
      tpu.vector_store %arg20[%c0_87, %c0_88, %c0_89], %156 {strides = array<i32>} : memref<1x8x64xf32, #tpu.memory_space<vmem>>, vector<1x8x64xf32>,
    } else {
    }
    %c0 = arith.constant 0 : index
    %c0_1 = arith.constant 0 : index
    %c0_2 = arith.constant 0 : index
    %3 = vector.load %arg20[%c0, %c0_1, %c0_2] : memref<1x8x64xf32, #tpu.memory_space<vmem>>, vector<1x8x64xf32>
    %4 = arith.truncf %3 : vector<1x8x64xf32> to vector<1x8x64xbf16>
    %5 = vector.shape_cast %4 : vector<1x8x64xbf16> to vector<1x1x8x64xbf16>
    %6 = vector.shape_cast %5 : vector<1x1x8x64xbf16> to vector<1x1x8x64xbf16>
    %7 = vector.broadcast %6 : vector<1x1x8x64xbf16> to vector<1x2x8x64xbf16>
    %8 = vector.shape_cast %7 : vector<1x2x8x64xbf16> to vector<2x8x64xbf16>
    %c0_3 = arith.constant 0 : index
    %c0_4 = arith.constant 0 : index
    %c0_5 = arith.constant 0 : index
    %c0_6 = arith.constant 0 : index
    %9 = vector.load %arg3[%c0_3, %c0_4, %c0_5, %c0_6] : memref<1x2x64x32xbf16, #tpu.memory_space<vmem>>, vector<1x2x64x32xbf16>
    %10 = vector.shape_cast %9 : vector<1x2x64x32xbf16> to vector<2x64x32xbf16>
    %11 = vector.shape_cast %10 : vector<2x64x32xbf16> to vector<1x2x64x32xbf16>
    %12 = vector.shape_cast %11 : vector<1x2x64x32xbf16> to vector<2x64x32xbf16>
    %c0_7 = arith.constant 0 : index
    %c0_8 = arith.constant 0 : index
    %c0_9 = arith.constant 0 : index
    %c0_10 = arith.constant 0 : index
    %13 = vector.load %arg6[%c0_7, %c0_8, %c0_9, %c0_10] : memref<1x2x1x32xf32, #tpu.memory_space<vmem>>, vector<1x2x1x32xf32>
    %14 = vector.shape_cast %13 : vector<1x2x1x32xf32> to vector<2x1x32xf32>
    %15 = vector.shape_cast %14 : vector<2x1x32xf32> to vector<1x2x1x32xf32>
    %16 = vector.shape_cast %15 : vector<1x2x1x32xf32> to vector<2x1x32xf32>
    "tpu.trace_start"() <{level = 10 : i32, message = "bsd,bdc->bsc"}> : () -> ()
    %cst = arith.constant dense<0.000000e+00> : vector<2x8x32xf32>
    %17 = tpu.matmul %8, %12, %cst {dimension_numbers = #tpu.dot_dimension_numbers<[2], [1], [1], [2], [0, 0, 0, 1, 1, 2], [0], [0]>} : vector<2x8x64xbf16>, vector<2x64x32xbf16>, vector<2x8x32xf32> -> vector<2x8x32xf32>
    "tpu.trace_stop"() : () -> ()
    %18 = vector.broadcast %16 : vector<2x1x32xf32> to vector<2x8x32xf32>
    %19 = arith.addf %17, %18 : vector<2x8x32xf32>
    %c0_11 = arith.constant 0 : index
    %c0_12 = arith.constant 0 : index
    %c0_13 = arith.constant 0 : index
    %c0_14 = arith.constant 0 : index
    %20 = vector.load %arg4[%c0_11, %c0_12, %c0_13, %c0_14] : memref<1x2x64x32xbf16, #tpu.memory_space<vmem>>, vector<1x2x64x32xbf16>
    %21 = vector.shape_cast %20 : vector<1x2x64x32xbf16> to vector<2x64x32xbf16>
    %22 = vector.shape_cast %21 : vector<2x64x32xbf16> to vector<1x2x64x32xbf16>
    %23 = vector.shape_cast %22 : vector<1x2x64x32xbf16> to vector<2x64x32xbf16>
    %c0_15 = arith.constant 0 : index
    %c0_16 = arith.constant 0 : index
    %c0_17 = arith.constant 0 : index
    %c0_18 = arith.constant 0 : index
    %24 = vector.load %arg7[%c0_15, %c0_16, %c0_17, %c0_18] : memref<1x2x1x32xf32, #tpu.memory_space<vmem>>, vector<1x2x1x32xf32>
    %25 = vector.shape_cast %24 : vector<1x2x1x32xf32> to vector<2x1x32xf32>
    %26 = vector.shape_cast %25 : vector<2x1x32xf32> to vector<1x2x1x32xf32>
    %27 = vector.shape_cast %26 : vector<1x2x1x32xf32> to vector<2x1x32xf32>
    "tpu.trace_start"() <{level = 10 : i32, message = "bsd,bdc->bsc"}> : () -> ()
    %cst_19 = arith.constant dense<0.000000e+00> : vector<2x8x32xf32>
    %28 = tpu.matmul %8, %23, %cst_19 {dimension_numbers = #tpu.dot_dimension_numbers<[2], [1], [1], [2], [0, 0, 0, 1, 1, 2], [0], [0]>} : vector<2x8x64xbf16>, vector<2x64x32xbf16>, vector<2x8x32xf32> -> vector<2x8x32xf32>
    "tpu.trace_stop"() : () -> ()
    %29 = vector.broadcast %27 : vector<2x1x32xf32> to vector<2x8x32xf32>
    %30 = arith.addf %28, %29 : vector<2x8x32xf32>
    %c0_20 = arith.constant 0 : index
    %c0_21 = arith.constant 0 : index
    %c0_22 = arith.constant 0 : index
    %c0_23 = arith.constant 0 : index
    %31 = vector.load %arg5[%c0_20, %c0_21, %c0_22, %c0_23] : memref<1x2x64x32xbf16, #tpu.memory_space<vmem>>, vector<1x2x64x32xbf16>
    %32 = vector.shape_cast %31 : vector<1x2x64x32xbf16> to vector<2x64x32xbf16>
    %33 = vector.shape_cast %32 : vector<2x64x32xbf16> to vector<1x2x64x32xbf16>
    %34 = vector.shape_cast %33 : vector<1x2x64x32xbf16> to vector<2x64x32xbf16>
    %c0_24 = arith.constant 0 : index
    %c0_25 = arith.constant 0 : index
    %c0_26 = arith.constant 0 : index
    %c0_27 = arith.constant 0 : index
    %35 = vector.load %arg8[%c0_24, %c0_25, %c0_26, %c0_27] : memref<1x2x1x32xf32, #tpu.memory_space<vmem>>, vector<1x2x1x32xf32>
    %36 = vector.shape_cast %35 : vector<1x2x1x32xf32> to vector<2x1x32xf32>
    %37 = vector.shape_cast %36 : vector<2x1x32xf32> to vector<1x2x1x32xf32>
    %38 = vector.shape_cast %37 : vector<1x2x1x32xf32> to vector<2x1x32xf32>
    "tpu.trace_start"() <{level = 10 : i32, message = "bsd,bdc->bsc"}> : () -> ()
    %cst_28 = arith.constant dense<0.000000e+00> : vector<2x8x32xf32>
    %39 = tpu.matmul %8, %34, %cst_28 {dimension_numbers = #tpu.dot_dimension_numbers<[2], [1], [1], [2], [0, 0, 0, 1, 1, 2], [0], [0]>} : vector<2x8x64xbf16>, vector<2x64x32xbf16>, vector<2x8x32xf32> -> vector<2x8x32xf32>
    "tpu.trace_stop"() : () -> ()
    %40 = vector.broadcast %38 : vector<2x1x32xf32> to vector<2x8x32xf32>
    %41 = arith.addf %39, %40 : vector<2x8x32xf32>
    %42 = arith.truncf %19 : vector<2x8x32xf32> to vector<2x8x32xbf16>
    %43 = arith.truncf %30 : vector<2x8x32xf32> to vector<2x8x32xbf16>
    "tpu.trace_start"() <{level = 10 : i32, message = "bqc,bkc->bqk"}> : () -> ()
    %cst_29 = arith.constant dense<0.000000e+00> : vector<2x8x8xf32>
    %44 = tpu.matmul %42, %43, %cst_29 {dimension_numbers = #tpu.dot_dimension_numbers<[2], [2], [1], [1], [0, 0, 0, 1, 1, 1], [0], [0]>} : vector<2x8x32xbf16>, vector<2x8x32xbf16>, vector<2x8x8xf32> -> vector<2x8x8xf32>
    "tpu.trace_stop"() : () -> ()
    %cst_30 = arith.constant 0.176776692 : f32
    %45 = vector.broadcast %cst_30 : f32 to vector<2x8x8xf32>
    %46 = arith.mulf %44, %45 : vector<2x8x8xf32>
    %cst_31 = arith.constant dense<0xFF800000> : vector<2x8xf32>
    %47 = vector.multi_reduction <maximumf>, %46, %cst_31 [2] : vector<2x8x8xf32> to vector<2x8xf32>
    %48 = vector.shape_cast %47 : vector<2x8xf32> to vector<2x8x1xf32>
    %49 = vector.broadcast %48 : vector<2x8x1xf32> to vector<2x8x8xf32>
    %50 = arith.subf %46, %49 : vector<2x8x8xf32>
    %51 = math.exp %50 : vector<2x8x8xf32>
    %cst_32 = arith.constant dense<0.000000e+00> : vector<2x8xf32>
    %52 = vector.multi_reduction <add>, %51, %cst_32 [2] : vector<2x8x8xf32> to vector<2x8xf32>
    %53 = vector.shape_cast %52 : vector<2x8xf32> to vector<2x8x1xf32>
    %54 = tpu.reciprocal %53 {approx = true} : vector<2x8x1xf32> -> vector<2x8x1xf32>
    %55 = vector.broadcast %54 : vector<2x8x1xf32> to vector<2x8x8xf32>
    %56 = arith.mulf %51, %55 : vector<2x8x8xf32>
    %57 = arith.truncf %56 : vector<2x8x8xf32> to vector<2x8x8xbf16>
    %58 = arith.truncf %41 : vector<2x8x32xf32> to vector<2x8x32xbf16>
    "tpu.trace_start"() <{level = 10 : i32, message = "bqk,bkc->bqc"}> : () -> ()
    %cst_33 = arith.constant dense<0.000000e+00> : vector<2x8x32xf32>
    %59 = tpu.matmul %57, %58, %cst_33 {dimension_numbers = #tpu.dot_dimension_numbers<[2], [1], [1], [2], [0, 0, 0, 1, 1, 2], [0], [0]>} : vector<2x8x8xbf16>, vector<2x8x32xbf16>, vector<2x8x32xf32> -> vector<2x8x32xf32>
    "tpu.trace_stop"() : () -> ()
    %c0_34 = arith.constant 0 : index
    %c0_35 = arith.constant 0 : index
    %c0_36 = arith.constant 0 : index
    %c0_37 = arith.constant 0 : index
    %60 = vector.load %arg9[%c0_34, %c0_35, %c0_36, %c0_37] : memref<1x2x32x64xbf16, #tpu.memory_space<vmem>>, vector<1x2x32x64xbf16>
    %61 = vector.shape_cast %60 : vector<1x2x32x64xbf16> to vector<2x32x64xbf16>
    %62 = vector.shape_cast %61 : vector<2x32x64xbf16> to vector<1x2x32x64xbf16>
    %63 = vector.shape_cast %62 : vector<1x2x32x64xbf16> to vector<2x32x64xbf16>
    %64 = arith.truncf %59 : vector<2x8x32xf32> to vector<2x8x32xbf16>
    "tpu.trace_start"() <{level = 10 : i32, message = "bqc,bcd->bqd"}> : () -> ()
    %cst_38 = arith.constant dense<0.000000e+00> : vector<2x8x64xf32>
    %65 = tpu.matmul %64, %63, %cst_38 {dimension_numbers = #tpu.dot_dimension_numbers<[2], [1], [1], [2], [0, 0, 0, 1, 1, 2], [0], [0]>} : vector<2x8x32xbf16>, vector<2x32x64xbf16>, vector<2x8x64xf32> -> vector<2x8x64xf32>
    "tpu.trace_stop"() : () -> ()
    %66 = vector.shape_cast %65 : vector<2x8x64xf32> to vector<1x2x8x64xf32>
    %cst_39 = arith.constant dense<0.000000e+00> : vector<1x8x64xf32>
    %67 = vector.multi_reduction <add>, %66, %cst_39 [1] : vector<1x2x8x64xf32> to vector<1x8x64xf32>
    %c0_40 = arith.constant 0 : index
    %c0_41 = arith.constant 0 : index
    %c0_42 = arith.constant 0 : index
    %68 = vector.load %arg10[%c0_40, %c0_41, %c0_42] : memref<1x1x64xf32, #tpu.memory_space<vmem>>, vector<1x1x64xf32>
    %69 = vector.shape_cast %68 : vector<1x1x64xf32> to vector<1x64xf32>
    %70 = vector.shape_cast %69 : vector<1x64xf32> to vector<1x1x64xf32>
    %71 = vector.broadcast %70 : vector<1x1x64xf32> to vector<1x8x64xf32>
    %72 = arith.addf %67, %71 : vector<1x8x64xf32>
    %73 = vector.shape_cast %3 : vector<1x8x64xf32> to vector<8x64xf32>
    %74 = vector.shape_cast %72 : vector<1x8x64xf32> to vector<8x64xf32>
    %75 = arith.addf %73, %74 : vector<8x64xf32>
    %c0_43 = arith.constant 0 : index
    %c0_44 = arith.constant 0 : index
    %c0_45 = arith.constant 0 : index
    %76 = vector.load %arg11[%c0_43, %c0_44, %c0_45] : memref<1x1x64xf32, #tpu.memory_space<vmem>>, vector<1x1x64xf32>
    %77 = vector.shape_cast %76 : vector<1x1x64xf32> to vector<1x64xf32>
    %c0_46 = arith.constant 0 : index
    %c0_47 = arith.constant 0 : index
    %c0_48 = arith.constant 0 : index
    %78 = vector.load %arg12[%c0_46, %c0_47, %c0_48] : memref<1x1x64xf32, #tpu.memory_space<vmem>>, vector<1x1x64xf32>
    %79 = vector.shape_cast %78 : vector<1x1x64xf32> to vector<1x64xf32>
    %cst_49 = arith.constant dense<0.000000e+00> : vector<8xf32>
    %80 = vector.multi_reduction <add>, %75, %cst_49 [1] : vector<8x64xf32> to vector<8xf32>
    %81 = vector.shape_cast %80 : vector<8xf32> to vector<8x1xf32>
    %cst_50 = arith.constant 6.400000e+01 : f32
    %82 = vector.broadcast %cst_50 : f32 to vector<8x1xf32>
    %83 = arith.divf %81, %82 : vector<8x1xf32>
    %84 = vector.broadcast %83 : vector<8x1xf32> to vector<8x64xf32>
    %85 = arith.subf %75, %84 : vector<8x64xf32>
    %86 = arith.mulf %85, %85 : vector<8x64xf32>
    %cst_51 = arith.constant dense<0.000000e+00> : vector<8xf32>
    %87 = vector.multi_reduction <add>, %86, %cst_51 [1] : vector<8x64xf32> to vector<8xf32>
    %88 = vector.shape_cast %87 : vector<8xf32> to vector<8x1xf32>
    %cst_52 = arith.constant 6.400000e+01 : f32
    %89 = vector.broadcast %cst_52 : f32 to vector<8x1xf32>
    %90 = arith.divf %88, %89 : vector<8x1xf32>
    %91 = vector.broadcast %83 : vector<8x1xf32> to vector<8x64xf32>
    %92 = arith.subf %75, %91 : vector<8x64xf32>
    %cst_53 = arith.constant 9.99999974E-6 : f32
    %93 = vector.broadcast %cst_53 : f32 to vector<8x1xf32>
    %94 = arith.addf %90, %93 : vector<8x1xf32>
    %95 = math.rsqrt %94 : vector<8x1xf32>
    %96 = vector.broadcast %95 : vector<8x1xf32> to vector<8x64xf32>
    %97 = arith.mulf %92, %96 : vector<8x64xf32>
    %98 = vector.broadcast %77 : vector<1x64xf32> to vector<8x64xf32>
    %99 = arith.mulf %97, %98 : vector<8x64xf32>
    %100 = vector.broadcast %79 : vector<1x64xf32> to vector<8x64xf32>
    %101 = arith.addf %99, %100 : vector<8x64xf32>
    %102 = arith.truncf %101 : vector<8x64xf32> to vector<8x64xbf16>
    %c0_54 = arith.constant 0 : index
    %c0_55 = arith.constant 0 : index
    %c0_56 = arith.constant 0 : index
    %103 = vector.load %arg13[%c0_54, %c0_55, %c0_56] : memref<1x64x128xbf16, #tpu.memory_space<vmem>>, vector<1x64x128xbf16>
    %104 = vector.shape_cast %103 : vector<1x64x128xbf16> to vector<64x128xbf16>
    "tpu.trace_start"() <{level = 10 : i32, message = "nd,df->nf"}> : () -> ()
    %cst_57 = arith.constant dense<0.000000e+00> : vector<8x128xf32>
    %105 = tpu.matmul %102, %104, %cst_57 {dimension_numbers = #tpu.dot_dimension_numbers<[1], [0], [0], [1], [0, 0, 1, 1], [], []>} : vector<8x64xbf16>, vector<64x128xbf16>, vector<8x128xf32> -> vector<8x128xf32>
    "tpu.trace_stop"() : () -> ()
    %c0_58 = arith.constant 0 : index
    %c0_59 = arith.constant 0 : index
    %c0_60 = arith.constant 0 : index
    %106 = vector.load %arg14[%c0_58, %c0_59, %c0_60] : memref<1x1x128xf32, #tpu.memory_space<vmem>>, vector<1x1x128xf32>
    %107 = vector.shape_cast %106 : vector<1x1x128xf32> to vector<1x128xf32>
    %108 = vector.broadcast %107 : vector<1x128xf32> to vector<8x128xf32>
    %109 = arith.addf %105, %108 : vector<8x128xf32>
    %110 = arith.negf %109 : vector<8x128xf32>
    %111 = math.exp %110 : vector<8x128xf32>
    %cst_61 = arith.constant 1.000000e+00 : f32
    %112 = vector.broadcast %cst_61 : f32 to vector<8x128xf32>
    %113 = arith.addf %112, %111 : vector<8x128xf32>
    %114 = arith.divf %112, %113 : vector<8x128xf32>
    %115 = arith.mulf %109, %114 : vector<8x128xf32>
    %116 = arith.truncf %115 : vector<8x128xf32> to vector<8x128xbf16>
    %c0_62 = arith.constant 0 : index
    %c0_63 = arith.constant 0 : index
    %c0_64 = arith.constant 0 : index
    %117 = vector.load %arg15[%c0_62, %c0_63, %c0_64] : memref<1x128x64xbf16, #tpu.memory_space<vmem>>, vector<1x128x64xbf16>
    %118 = vector.shape_cast %117 : vector<1x128x64xbf16> to vector<128x64xbf16>
    "tpu.trace_start"() <{level = 10 : i32, message = "nf,fd->nd"}> : () -> ()
    %cst_65 = arith.constant dense<0.000000e+00> : vector<8x64xf32>
    %119 = tpu.matmul %116, %118, %cst_65 {dimension_numbers = #tpu.dot_dimension_numbers<[1], [0], [0], [1], [0, 0, 1, 1], [], []>} : vector<8x128xbf16>, vector<128x64xbf16>, vector<8x64xf32> -> vector<8x64xf32>
    "tpu.trace_stop"() : () -> ()
    %c0_66 = arith.constant 0 : index
    %c0_67 = arith.constant 0 : index
    %c0_68 = arith.constant 0 : index
    %120 = vector.load %arg16[%c0_66, %c0_67, %c0_68] : memref<1x1x64xf32, #tpu.memory_space<vmem>>, vector<1x1x64xf32>
    %121 = vector.shape_cast %120 : vector<1x1x64xf32> to vector<1x64xf32>
    %122 = vector.broadcast %121 : vector<1x64xf32> to vector<8x64xf32>
    %123 = arith.addf %119, %122 : vector<8x64xf32>
    %124 = arith.addf %101, %123 : vector<8x64xf32>
    %c0_69 = arith.constant 0 : index
    %c0_70 = arith.constant 0 : index
    %c0_71 = arith.constant 0 : index
    %125 = vector.load %arg17[%c0_69, %c0_70, %c0_71] : memref<1x1x64xf32, #tpu.memory_space<vmem>>, vector<1x1x64xf32>
    %126 = vector.shape_cast %125 : vector<1x1x64xf32> to vector<1x64xf32>
    %c0_72 = arith.constant 0 : index
    %c0_73 = arith.constant 0 : index
    %c0_74 = arith.constant 0 : index
    %127 = vector.load %arg18[%c0_72, %c0_73, %c0_74] : memref<1x1x64xf32, #tpu.memory_space<vmem>>, vector<1x1x64xf32>
    %128 = vector.shape_cast %127 : vector<1x1x64xf32> to vector<1x64xf32>
    %cst_75 = arith.constant dense<0.000000e+00> : vector<8xf32>
    %129 = vector.multi_reduction <add>, %124, %cst_75 [1] : vector<8x64xf32> to vector<8xf32>
    %130 = vector.shape_cast %129 : vector<8xf32> to vector<8x1xf32>
    %cst_76 = arith.constant 6.400000e+01 : f32
    %131 = vector.broadcast %cst_76 : f32 to vector<8x1xf32>
    %132 = arith.divf %130, %131 : vector<8x1xf32>
    %133 = vector.broadcast %132 : vector<8x1xf32> to vector<8x64xf32>
    %134 = arith.subf %124, %133 : vector<8x64xf32>
    %135 = arith.mulf %134, %134 : vector<8x64xf32>
    %cst_77 = arith.constant dense<0.000000e+00> : vector<8xf32>
    %136 = vector.multi_reduction <add>, %135, %cst_77 [1] : vector<8x64xf32> to vector<8xf32>
    %137 = vector.shape_cast %136 : vector<8xf32> to vector<8x1xf32>
    %cst_78 = arith.constant 6.400000e+01 : f32
    %138 = vector.broadcast %cst_78 : f32 to vector<8x1xf32>
    %139 = arith.divf %137, %138 : vector<8x1xf32>
    %140 = vector.broadcast %132 : vector<8x1xf32> to vector<8x64xf32>
    %141 = arith.subf %124, %140 : vector<8x64xf32>
    %cst_79 = arith.constant 9.99999974E-6 : f32
    %142 = vector.broadcast %cst_79 : f32 to vector<8x1xf32>
    %143 = arith.addf %139, %142 : vector<8x1xf32>
    %144 = math.rsqrt %143 : vector<8x1xf32>
    %145 = vector.broadcast %144 : vector<8x1xf32> to vector<8x64xf32>
    %146 = arith.mulf %141, %145 : vector<8x64xf32>
    %147 = vector.broadcast %126 : vector<1x64xf32> to vector<8x64xf32>
    %148 = arith.mulf %146, %147 : vector<8x64xf32>
    %149 = vector.broadcast %128 : vector<1x64xf32> to vector<8x64xf32>
    %150 = arith.addf %148, %149 : vector<8x64xf32>
    %151 = vector.shape_cast %150 : vector<8x64xf32> to vector<1x8x64xf32>
    %c0_80 = arith.constant 0 : index
    %c0_81 = arith.constant 0 : index
    %c0_82 = arith.constant 0 : index
    %152 = vector.load %arg20[%c0_80, %c0_81, %c0_82] : memref<1x8x64xf32, #tpu.memory_space<vmem>>, vector<1x8x64xf32>
    tpu.vector_store %arg20[%c0_80, %c0_81, %c0_82], %151 {strides = array<i32>} : memref<1x8x64xf32, #tpu.memory_space<vmem>>, vector<1x8x64xf32>,
    %c1_i32 = arith.constant 1 : i32
    %153 = arith.cmpi eq, %arg1, %c1_i32 : i32
    %154 = arith.extui %153 : i1 to i32
    %c0_i32_83 = arith.constant 0 : i32
    %155 = arith.cmpi ne, %154, %c0_i32_83 : i32
    scf.if %155 {
      %156 = vector.shape_cast %150 : vector<8x64xf32> to vector<1x8x64xf32>
      %c0_84 = arith.constant 0 : index
      %c0_85 = arith.constant 0 : index
      %c0_86 = arith.constant 0 : index
      %157 = vector.load %arg19[%c0_84, %c0_85, %c0_86] : memref<1x8x64xf32, #tpu.memory_space<vmem>>, vector<1x8x64xf32>
      tpu.vector_store %arg19[%c0_84, %c0_85, %c0_86], %156 {strides = array<i32>} : memref<1x8x64xf32, #tpu.memory_space<vmem>>, vector<1x8x64xf32>,
    } else {
    }
    return
  }
  func.func @transform_0(%arg0: i32, %arg1: i32) -> (i32, i32, i32) {
    %c0_i32 = arith.constant 0 : i32
    %c0_i32_0 = arith.constant 0 : i32
    %c0_i32_1 = arith.constant 0 : i32
    return %arg0, %c0_i32, %c0_i32_0 : i32, i32, i32
  }
  func.func @transform_1(%arg0: i32, %arg1: i32) -> (i32, i32, i32, i32) {
    %c0_i32 = arith.constant 0 : i32
    %c0_i32_0 = arith.constant 0 : i32
    %c0_i32_1 = arith.constant 0 : i32
    %c0_i32_2 = arith.constant 0 : i32
    return %arg1, %c0_i32, %c0_i32_0, %c0_i32_1 : i32, i32, i32, i32
  }
  func.func @transform_2(%arg0: i32, %arg1: i32) -> (i32, i32, i32, i32) {
    %c0_i32 = arith.constant 0 : i32
    %c0_i32_0 = arith.constant 0 : i32
    %c0_i32_1 = arith.constant 0 : i32
    %c0_i32_2 = arith.constant 0 : i32
    return %arg1, %c0_i32, %c0_i32_0, %c0_i32_1 : i32, i32, i32, i32
  }
  func.func @transform_3(%arg0: i32, %arg1: i32) -> (i32, i32, i32, i32) {
    %c0_i32 = arith.constant 0 : i32
    %c0_i32_0 = arith.constant 0 : i32
    %c0_i32_1 = arith.constant 0 : i32
    %c0_i32_2 = arith.constant 0 : i32
    return %arg1, %c0_i32, %c0_i32_0, %c0_i32_1 : i32, i32, i32, i32
  }
  func.func @transform_4(%arg0: i32, %arg1: i32) -> (i32, i32, i32, i32) {
    %c0_i32 = arith.constant 0 : i32
    %c0_i32_0 = arith.constant 0 : i32
    %c0_i32_1 = arith.constant 0 : i32
    %c0_i32_2 = arith.constant 0 : i32
    return %arg1, %c0_i32, %c0_i32_0, %c0_i32_1 : i32, i32, i32, i32
  }
  func.func @transform_5(%arg0: i32, %arg1: i32) -> (i32, i32, i32, i32) {
    %c0_i32 = arith.constant 0 : i32
    %c0_i32_0 = arith.constant 0 : i32
    %c0_i32_1 = arith.constant 0 : i32
    %c0_i32_2 = arith.constant 0 : i32
    return %arg1, %c0_i32, %c0_i32_0, %c0_i32_1 : i32, i32, i32, i32
  }
  func.func @transform_6(%arg0: i32, %arg1: i32) -> (i32, i32, i32, i32) {
    %c0_i32 = arith.constant 0 : i32
    %c0_i32_0 = arith.constant 0 : i32
    %c0_i32_1 = arith.constant 0 : i32
    %c0_i32_2 = arith.constant 0 : i32
    return %arg1, %c0_i32, %c0_i32_0, %c0_i32_1 : i32, i32, i32, i32
  }
  func.func @transform_7(%arg0: i32, %arg1: i32) -> (i32, i32, i32, i32) {
    %c0_i32 = arith.constant 0 : i32
    %c0_i32_0 = arith.constant 0 : i32
    %c0_i32_1 = arith.constant 0 : i32
    %c0_i32_2 = arith.constant 0 : i32
    return %arg1, %c0_i32, %c0_i32_0, %c0_i32_1 : i32, i32, i32, i32
  }
  func.func @transform_8(%arg0: i32, %arg1: i32) -> (i32, i32, i32) {
    %c0_i32 = arith.constant 0 : i32
    %c0_i32_0 = arith.constant 0 : i32
    %c0_i32_1 = arith.constant 0 : i32
    return %arg1, %c0_i32, %c0_i32_0 : i32, i32, i32
  }
  func.func @transform_9(%arg0: i32, %arg1: i32) -> (i32, i32, i32) {
    %c0_i32 = arith.constant 0 : i32
    %c0_i32_0 = arith.constant 0 : i32
    %c0_i32_1 = arith.constant 0 : i32
    return %arg1, %c0_i32, %c0_i32_0 : i32, i32, i32
  }
  func.func @transform_10(%arg0: i32, %arg1: i32) -> (i32, i32, i32) {
    %c0_i32 = arith.constant 0 : i32
    %c0_i32_0 = arith.constant 0 : i32
    %c0_i32_1 = arith.constant 0 : i32
    return %arg1, %c0_i32, %c0_i32_0 : i32, i32, i32
  }
  func.func @transform_11(%arg0: i32, %arg1: i32) -> (i32, i32, i32) {
    %c0_i32 = arith.constant 0 : i32
    %c0_i32_0 = arith.constant 0 : i32
    %c0_i32_1 = arith.constant 0 : i32
    return %arg1, %c0_i32, %c0_i32_0 : i32, i32, i32
  }
  func.func @transform_12(%arg0: i32, %arg1: i32) -> (i32, i32, i32) {
    %c0_i32 = arith.constant 0 : i32
    %c0_i32_0 = arith.constant 0 : i32
    %c0_i32_1 = arith.constant 0 : i32
    return %arg1, %c0_i32, %c0_i32_0 : i32, i32, i32
  }
  func.func @transform_13(%arg0: i32, %arg1: i32) -> (i32, i32, i32) {
    %c0_i32 = arith.constant 0 : i32
    %c0_i32_0 = arith.constant 0 : i32
    %c0_i32_1 = arith.constant 0 : i32
    return %arg1, %c0_i32, %c0_i32_0 : i32, i32, i32
  }
  func.func @transform_14(%arg0: i32, %arg1: i32) -> (i32, i32, i32) {
    %c0_i32 = arith.constant 0 : i32
    %c0_i32_0 = arith.constant 0 : i32
    %c0_i32_1 = arith.constant 0 : i32
    return %arg1, %c0_i32, %c0_i32_0 : i32, i32, i32
  }
  func.func @transform_15(%arg0: i32, %arg1: i32) -> (i32, i32, i32) {
    %c0_i32 = arith.constant 0 : i32
    %c0_i32_0 = arith.constant 0 : i32
    %c0_i32_1 = arith.constant 0 : i32
    return %arg1, %c0_i32, %c0_i32_0 : i32, i32, i32
  }
  func.func @transform_16(%arg0: i32, %arg1: i32) -> (i32, i32, i32) {
    %c0_i32 = arith.constant 0 : i32
    %c0_i32_0 = arith.constant 0 : i32
    %c0_i32_1 = arith.constant 0 : i32
    return %arg1, %c0_i32, %c0_i32_0 : i32, i32, i32
  }
  func.func @transform_17(%arg0: i32, %arg1: i32) -> (i32, i32, i32) {
    %c0_i32 = arith.constant 0 : i32
    %c0_i32_0 = arith.constant 0 : i32
    %c0_i32_1 = arith.constant 0 : i32
    return %arg0, %c0_i32, %c0_i32_0 : i32, i32, i32
  }
}

</mosaic_0001>

<llo_original>
// kernel: tpu_custom_call.1
$region0: #{tpu_custom_call.1}
  #allocation0 [shape = 'u32[]', space=smem, size = 0x4, offset = 0x4, fixed_abs, tag = 'smem constant byte address 0x4 - core index']
  #allocation1 [shape = 'u32[144,128]{1,0:T(1,128)}', space=vmem, size = 0x12000, scoped, tag = 'internal scratch']
  #allocation2 [shape = 'f32[1,8,64]{2,1,0:T(8,128)}', space=vmem, size = 0x1000, scoped, tag = 'scratch operand']
  %s0 = inlined_call_operand.vmem [shape: f32[2,8,64], index: 0, kind: input, shape index: {}]
  %s1 = inlined_call_operand.vmem [shape: bf16[2,2,64,32], index: 1, kind: input, shape index: {}]
  %s2 = inlined_call_operand.vmem [shape: bf16[2,2,64,32], index: 2, kind: input, shape index: {}]
  %s3 = inlined_call_operand.vmem [shape: bf16[2,2,64,32], index: 3, kind: input, shape index: {}]
  %s4 = inlined_call_operand.vmem [shape: f32[2,2,1,32], index: 4, kind: input, shape index: {}]
  %s5 = inlined_call_operand.vmem [shape: f32[2,2,1,32], index: 5, kind: input, shape index: {}]
  %s6 = inlined_call_operand.vmem [shape: f32[2,2,1,32], index: 6, kind: input, shape index: {}]
  %s7 = inlined_call_operand.vmem [shape: bf16[2,2,32,64], index: 7, kind: input, shape index: {}]
  %s8 = inlined_call_operand.vmem [shape: f32[2,1,64], index: 8, kind: input, shape index: {}]
  %s9 = inlined_call_operand.vmem [shape: f32[2,1,64], index: 9, kind: input, shape index: {}]
  %s10 = inlined_call_operand.vmem [shape: f32[2,1,64], index: 10, kind: input, shape index: {}]
  %s11 = inlined_call_operand.vmem [shape: bf16[2,64,128], index: 11, kind: input, shape index: {}]
  %s12 = inlined_call_operand.vmem [shape: f32[2,1,128], index: 12, kind: input, shape index: {}]
  %s13 = inlined_call_operand.vmem [shape: bf16[2,128,64], index: 13, kind: input, shape index: {}]
  %s14 = inlined_call_operand.vmem [shape: f32[2,1,64], index: 14, kind: input, shape index: {}]
  %s15 = inlined_call_operand.vmem [shape: f32[2,1,64], index: 15, kind: input, shape index: {}]
  %s16 = inlined_call_operand.vmem [shape: f32[2,1,64], index: 16, kind: input, shape index: {}]
  %s17 = inlined_call_operand.hbm [shape: f32[2,8,64], index: 17, kind: output, shape index: {}]
  %s18 = sld [smem:[#allocation0]]
  $region109: #{tpu_custom_call.1} parent=0
    _
  %s20 = ssub.s32 1, %s18
  %s21 = scalar_select 0, %s20, %s18
  $region1: #{tpu_custom_call.1} parent=0
    #allocation3 [shape = 'u8[8192]{0}', space=vmem, size = 0x2000, scoped, tag = 'output window, operand 0']
    #allocation4 [shape = 's32[2]{0}', space=sflag, size = 0x8, scoped, tag = 'scoped memory for tpu_custom_call.1']
    %22 = vsyncpa [#allocation4], 0
    %s23 = scalar_lea.sflag [#allocation4], 1
    %24 = vsyncpa %s23, 0
    loop: start=0, step=1, limit=6
    $region2: #{tpu_custom_call.1} parent=1 // loop_pre_header
      _
    $region3: #{tpu_custom_call.1} parent=1 // loop_header
      %s26 = sphi 0, %s30
      %p27 = scmp.ge.s32.totalorder %s26, 6
      %s33 = sphi 0, %s45
      %s34 = sphi 0, %s41
      %s35 = sphi 0, %s33
      %s36 = sphi 0, %s34
      %s37 = sphi 0, %s35
      %s38 = sphi 0, %s36
      %s48 = sphi 0, %s50
      %s51 = sphi 0, %s48
      %s52 = sphi 0, %s51
      %s68 = sphi 0, %s52
      %s74 = sphi 0, %s76
      %s77 = sphi 0, %s74
      %s78 = sphi 0, %s77
      %s94 = sphi 0, %s78
      %s100 = sphi 0, %s102
      %s103 = sphi 0, %s100
      %s104 = sphi 0, %s103
      %s120 = sphi 0, %s104
      %s126 = sphi 0, %s128
      %s129 = sphi 0, %s126
      %s130 = sphi 0, %s129
      %s146 = sphi 0, %s130
      %s152 = sphi 0, %s154
      %s155 = sphi 0, %s152
      %s156 = sphi 0, %s155
      %s172 = sphi 0, %s156
      %s178 = sphi 0, %s180
      %s181 = sphi 0, %s178
      %s182 = sphi 0, %s181
      %s198 = sphi 0, %s182
      %s204 = sphi 0, %s206
      %s207 = sphi 0, %s204
      %s208 = sphi 0, %s207
      %s224 = sphi 0, %s208
      %s230 = sphi 0, %s232
      %s233 = sphi 0, %s230
      %s234 = sphi 0, %s233
      %s250 = sphi 0, %s234
      %s256 = sphi 0, %s258
      %s259 = sphi 0, %s256
      %s260 = sphi 0, %s259
      %s276 = sphi 0, %s260
      %s282 = sphi 0, %s284
      %s285 = sphi 0, %s282
      %s286 = sphi 0, %s285
      %s302 = sphi 0, %s286
      %s308 = sphi 0, %s310
      %s311 = sphi 0, %s308
      %s312 = sphi 0, %s311
      %s328 = sphi 0, %s312
      %s334 = sphi 0, %s336
      %s337 = sphi 0, %s334
      %s338 = sphi 0, %s337
      %s354 = sphi 0, %s338
      %s360 = sphi 0, %s362
      %s363 = sphi 0, %s360
      %s364 = sphi 0, %s363
      %s380 = sphi 0, %s364
      %s386 = sphi 0, %s388
      %s389 = sphi 0, %s386
      %s390 = sphi 0, %s389
      %s406 = sphi 0, %s390
      %s412 = sphi 0, %s414
      %s415 = sphi 0, %s412
      %s416 = sphi 0, %s415
      %s432 = sphi 0, %s416
      %s438 = sphi 0, %s440
      %s441 = sphi 0, %s438
      %s442 = sphi 0, %s441
      %s458 = sphi 0, %s442
      %s464 = sphi 0, %s466
      %s467 = sphi 0, %s464
      %s468 = sphi 0, %s467
      %s484 = sphi 0, %s468
      %s490 = sphi 0, %s492
      %s493 = sphi 0, %s490
      %s494 = sphi 0, %s493
      %s510 = sphi 0, %s494
    $region4: #{tpu_custom_call.1} parent=1 // loop_header_branch
      %29 = sbr.rel (%p27) target = $region8
    $region5: #{tpu_custom_call.1} parent=1 // loop_body
      %s31 = ssub.s32 %s26, 1
      %s32 = ssub.s32 %s26, 2
      %s39 = sadd.s32 1, %s34
      %p40 = scmp.ge.s32.totalorder %s39, 2
      %s41 = scalar_select %p40, 0, %s39
      %s42 = sadd.s32 1, %s33
      %s43 = scalar_select %p40, %s42, %s33
      %p44 = scmp.ge.s32.totalorder %s43, 2
      %s45 = scalar_select %p44, 0, %s43
      %s46 = ssub.s32 %s33, %s45
      %p47 = scmp.eq.s32.totalorder %s46, 0
      %s49 = sadd.s32 %s48, 1
      %s50 = scalar_select %p47, %s48, %s49
      %p53 = pneg %p47
      %p54 = scmp.eq.s32.totalorder %s26, 3
      %p55 = por %p53, %p54
      %p56 = scmp.ne.s32.totalorder %s48, %s51
      %p57 = scmp.eq.s32.totalorder %s26, 0
      %p58 = por %p56, %p57
      %p59 = scmp.ne.s32.totalorder %s48, %s51
      %p60 = scmp.eq.s32.totalorder %s31, 3
      %p61 = por %p59, %p60
      %p62 = scmp.ne.s32.totalorder %s51, %s52
      %p63 = scmp.eq.s32.totalorder %s31, 0
      %p64 = por %p62, %p63
      %p65 = scmp.ne.s32.totalorder %s51, %s52
      %p66 = scmp.eq.s32.totalorder %s32, 3
      %p67 = por %p65, %p66
      %p69 = scmp.ne.s32.totalorder %s52, %s68
      %p70 = scmp.eq.s32.totalorder %s32, 0
      %p71 = por %p69, %p70
      %s72 = ssub.s32 %s34, %s41
      %p73 = scmp.eq.s32.totalorder %s72, 0
      %s75 = sadd.s32 %s74, 1
      %s76 = scalar_select %p73, %s74, %s75
      %p79 = pneg %p73
      %p80 = scmp.eq.s32.totalorder %s26, 3
      %p81 = por %p79, %p80
      %p82 = scmp.ne.s32.totalorder %s74, %s77
      %p83 = scmp.eq.s32.totalorder %s26, 0
      %p84 = por %p82, %p83
      %p85 = scmp.ne.s32.totalorder %s74, %s77
      %p86 = scmp.eq.s32.totalorder %s31, 3
      %p87 = por %p85, %p86
      %p88 = scmp.ne.s32.totalorder %s77, %s78
      %p89 = scmp.eq.s32.totalorder %s31, 0
      %p90 = por %p88, %p89
      %p91 = scmp.ne.s32.totalorder %s77, %s78
      %p92 = scmp.eq.s32.totalorder %s32, 3
      %p93 = por %p91, %p92
      %p95 = scmp.ne.s32.totalorder %s78, %s94
      %p96 = scmp.eq.s32.totalorder %s32, 0
      %p97 = por %p95, %p96
      %s98 = ssub.s32 %s34, %s41
      %p99 = scmp.eq.s32.totalorder %s98, 0
      %s101 = sadd.s32 %s100, 1
      %s102 = scalar_select %p99, %s100, %s101
      %p105 = pneg %p99
      %p106 = scmp.eq.s32.totalorder %s26, 3
      %p107 = por %p105, %p106
      %p108 = scmp.ne.s32.totalorder %s100, %s103
      %p109 = scmp.eq.s32.totalorder %s26, 0
      %p110 = por %p108, %p109
      %p111 = scmp.ne.s32.totalorder %s100, %s103
      %p112 = scmp.eq.s32.totalorder %s31, 3
      %p113 = por %p111, %p112
      %p114 = scmp.ne.s32.totalorder %s103, %s104
      %p115 = scmp.eq.s32.totalorder %s31, 0
      %p116 = por %p114, %p115
      %p117 = scmp.ne.s32.totalorder %s103, %s104
      %p118 = scmp.eq.s32.totalorder %s32, 3
      %p119 = por %p117, %p118
      %p121 = scmp.ne.s32.totalorder %s104, %s120
      %p122 = scmp.eq.s32.totalorder %s32, 0
      %p123 = por %p121, %p122
      %s124 = ssub.s32 %s34, %s41
      %p125 = scmp.eq.s32.totalorder %s124, 0
      %s127 = sadd.s32 %s126, 1
      %s128 = scalar_select %p125, %s126, %s127
      %p131 = pneg %p125
      %p132 = scmp.eq.s32.totalorder %s26, 3
      %p133 = por %p131, %p132
      %p134 = scmp.ne.s32.totalorder %s126, %s129
      %p135 = scmp.eq.s32.totalorder %s26, 0
      %p136 = por %p134, %p135
      %p137 = scmp.ne.s32.totalorder %s126, %s129
      %p138 = scmp.eq.s32.totalorder %s31, 3
      %p139 = por %p137, %p138
      %p140 = scmp.ne.s32.totalorder %s129, %s130
      %p141 = scmp.eq.s32.totalorder %s31, 0
      %p142 = por %p140, %p141
      %p143 = scmp.ne.s32.totalorder %s129, %s130
      %p144 = scmp.eq.s32.totalorder %s32, 3
      %p145 = por %p143, %p144
      %p147 = scmp.ne.s32.totalorder %s130, %s146
      %p148 = scmp.eq.s32.totalorder %s32, 0
      %p149 = por %p147, %p148
      %s150 = ssub.s32 %s34, %s41
      %p151 = scmp.eq.s32.totalorder %s150, 0
      %s153 = sadd.s32 %s152, 1
      %s154 = scalar_select %p151, %s152, %s153
      %p157 = pneg %p151
      %p158 = scmp.eq.s32.totalorder %s26, 3
      %p159 = por %p157, %p158
      %p160 = scmp.ne.s32.totalorder %s152, %s155
      %p161 = scmp.eq.s32.totalorder %s26, 0
      %p162 = por %p160, %p161
      %p163 = scmp.ne.s32.totalorder %s152, %s155
      %p164 = scmp.eq.s32.totalorder %s31, 3
      %p165 = por %p163, %p164
      %p166 = scmp.ne.s32.totalorder %s155, %s156
      %p167 = scmp.eq.s32.totalorder %s31, 0
      %p168 = por %p166, %p167
      %p169 = scmp.ne.s32.totalorder %s155, %s156
      %p170 = scmp.eq.s32.totalorder %s32, 3
      %p171 = por %p169, %p170
      %p173 = scmp.ne.s32.totalorder %s156, %s172
      %p174 = scmp.eq.s32.totalorder %s32, 0
      %p175 = por %p173, %p174
      %s176 = ssub.s32 %s34, %s41
      %p177 = scmp.eq.s32.totalorder %s176, 0
      %s179 = sadd.s32 %s178, 1
      %s180 = scalar_select %p177, %s178, %s179
      %p183 = pneg %p177
      %p184 = scmp.eq.s32.totalorder %s26, 3
      %p185 = por %p183, %p184
      %p186 = scmp.ne.s32.totalorder %s178, %s181
      %p187 = scmp.eq.s32.totalorder %s26, 0
      %p188 = por %p186, %p187
      %p189 = scmp.ne.s32.totalorder %s178, %s181
      %p190 = scmp.eq.s32.totalorder %s31, 3
      %p191 = por %p189, %p190
      %p192 = scmp.ne.s32.totalorder %s181, %s182
      %p193 = scmp.eq.s32.totalorder %s31, 0
      %p194 = por %p192, %p193
      %p195 = scmp.ne.s32.totalorder %s181, %s182
      %p196 = scmp.eq.s32.totalorder %s32, 3
      %p197 = por %p195, %p196
      %p199 = scmp.ne.s32.totalorder %s182, %s198
      %p200 = scmp.eq.s32.totalorder %s32, 0
      %p201 = por %p199, %p200
      %s202 = ssub.s32 %s34, %s41
      %p203 = scmp.eq.s32.totalorder %s202, 0
      %s205 = sadd.s32 %s204, 1
      %s206 = scalar_select %p203, %s204, %s205
      %p209 = pneg %p203
      %p210 = scmp.eq.s32.totalorder %s26, 3
      %p211 = por %p209, %p210
      %p212 = scmp.ne.s32.totalorder %s204, %s207
      %p213 = scmp.eq.s32.totalorder %s26, 0
      %p214 = por %p212, %p213
      %p215 = scmp.ne.s32.totalorder %s204, %s207
      %p216 = scmp.eq.s32.totalorder %s31, 3
      %p217 = por %p215, %p216
      %p218 = scmp.ne.s32.totalorder %s207, %s208
      %p219 = scmp.eq.s32.totalorder %s31, 0
      %p220 = por %p218, %p219
      %p221 = scmp.ne.s32.totalorder %s207, %s208
      %p222 = scmp.eq.s32.totalorder %s32, 3
      %p223 = por %p221, %p222
      %p225 = scmp.ne.s32.totalorder %s208, %s224
      %p226 = scmp.eq.s32.totalorder %s32, 0
      %p227 = por %p225, %p226
      %s228 = ssub.s32 %s34, %s41
      %p229 = scmp.eq.s32.totalorder %s228, 0
      %s231 = sadd.s32 %s230, 1
      %s232 = scalar_select %p229, %s230, %s231
      %p235 = pneg %p229
      %p236 = scmp.eq.s32.totalorder %s26, 3
      %p237 = por %p235, %p236
      %p238 = scmp.ne.s32.totalorder %s230, %s233
      %p239 = scmp.eq.s32.totalorder %s26, 0
      %p240 = por %p238, %p239
      %p241 = scmp.ne.s32.totalorder %s230, %s233
      %p242 = scmp.eq.s32.totalorder %s31, 3
      %p243 = por %p241, %p242
      %p244 = scmp.ne.s32.totalorder %s233, %s234
      %p245 = scmp.eq.s32.totalorder %s31, 0
      %p246 = por %p244, %p245
      %p247 = scmp.ne.s32.totalorder %s233, %s234
      %p248 = scmp.eq.s32.totalorder %s32, 3
      %p249 = por %p247, %p248
      %p251 = scmp.ne.s32.totalorder %s234, %s250
      %p252 = scmp.eq.s32.totalorder %s32, 0
      %p253 = por %p251, %p252
      %s254 = ssub.s32 %s34, %s41
      %p255 = scmp.eq.s32.totalorder %s254, 0
      %s257 = sadd.s32 %s256, 1
      %s258 = scalar_select %p255, %s256, %s257
      %p261 = pneg %p255
      %p262 = scmp.eq.s32.totalorder %s26, 3
      %p263 = por %p261, %p262
      %p264 = scmp.ne.s32.totalorder %s256, %s259
      %p265 = scmp.eq.s32.totalorder %s26, 0
      %p266 = por %p264, %p265
      %p267 = scmp.ne.s32.totalorder %s256, %s259
      %p268 = scmp.eq.s32.totalorder %s31, 3
      %p269 = por %p267, %p268
      %p270 = scmp.ne.s32.totalorder %s259, %s260
      %p271 = scmp.eq.s32.totalorder %s31, 0
      %p272 = por %p270, %p271
      %p273 = scmp.ne.s32.totalorder %s259, %s260
      %p274 = scmp.eq.s32.totalorder %s32, 3
      %p275 = por %p273, %p274
      %p277 = scmp.ne.s32.totalorder %s260, %s276
      %p278 = scmp.eq.s32.totalorder %s32, 0
      %p279 = por %p277, %p278
      %s280 = ssub.s32 %s34, %s41
      %p281 = scmp.eq.s32.totalorder %s280, 0
      %s283 = sadd.s32 %s282, 1
      %s284 = scalar_select %p281, %s282, %s283
      %p287 = pneg %p281
      %p288 = scmp.eq.s32.totalorder %s26, 3
      %p289 = por %p287, %p288
      %p290 = scmp.ne.s32.totalorder %s282, %s285
      %p291 = scmp.eq.s32.totalorder %s26, 0
      %p292 = por %p290, %p291
      %p293 = scmp.ne.s32.totalorder %s282, %s285
      %p294 = scmp.eq.s32.totalorder %s31, 3
      %p295 = por %p293, %p294
      %p296 = scmp.ne.s32.totalorder %s285, %s286
      %p297 = scmp.eq.s32.totalorder %s31, 0
      %p298 = por %p296, %p297
      %p299 = scmp.ne.s32.totalorder %s285, %s286
      %p300 = scmp.eq.s32.totalorder %s32, 3
      %p301 = por %p299, %p300
      %p303 = scmp.ne.s32.totalorder %s286, %s302
      %p304 = scmp.eq.s32.totalorder %s32, 0
      %p305 = por %p303, %p304
      %s306 = ssub.s32 %s34, %s41
      %p307 = scmp.eq.s32.totalorder %s306, 0
      %s309 = sadd.s32 %s308, 1
      %s310 = scalar_select %p307, %s308, %s309
      %p313 = pneg %p307
      %p314 = scmp.eq.s32.totalorder %s26, 3
      %p315 = por %p313, %p314
      %p316 = scmp.ne.s32.totalorder %s308, %s311
      %p317 = scmp.eq.s32.totalorder %s26, 0
      %p318 = por %p316, %p317
      %p319 = scmp.ne.s32.totalorder %s308, %s311
      %p320 = scmp.eq.s32.totalorder %s31, 3
      %p321 = por %p319, %p320
      %p322 = scmp.ne.s32.totalorder %s311, %s312
      %p323 = scmp.eq.s32.totalorder %s31, 0
      %p324 = por %p322, %p323
      %p325 = scmp.ne.s32.totalorder %s311, %s312
      %p326 = scmp.eq.s32.totalorder %s32, 3
      %p327 = por %p325, %p326
      %p329 = scmp.ne.s32.totalorder %s312, %s328
      %p330 = scmp.eq.s32.totalorder %s32, 0
      %p331 = por %p329, %p330
      %s332 = ssub.s32 %s34, %s41
      %p333 = scmp.eq.s32.totalorder %s332, 0
      %s335 = sadd.s32 %s334, 1
      %s336 = scalar_select %p333, %s334, %s335
      %p339 = pneg %p333
      %p340 = scmp.eq.s32.totalorder %s26, 3
      %p341 = por %p339, %p340
      %p342 = scmp.ne.s32.totalorder %s334, %s337
      %p343 = scmp.eq.s32.totalorder %s26, 0
      %p344 = por %p342, %p343
      %p345 = scmp.ne.s32.totalorder %s334, %s337
      %p346 = scmp.eq.s32.totalorder %s31, 3
      %p347 = por %p345, %p346
      %p348 = scmp.ne.s32.totalorder %s337, %s338
      %p349 = scmp.eq.s32.totalorder %s31, 0
      %p350 = por %p348, %p349
      %p351 = scmp.ne.s32.totalorder %s337, %s338
      %p352 = scmp.eq.s32.totalorder %s32, 3
      %p353 = por %p351, %p352
      %p355 = scmp.ne.s32.totalorder %s338, %s354
      %p356 = scmp.eq.s32.totalorder %s32, 0
      %p357 = por %p355, %p356
      %s358 = ssub.s32 %s34, %s41
      %p359 = scmp.eq.s32.totalorder %s358, 0
      %s361 = sadd.s32 %s360, 1
      %s362 = scalar_select %p359, %s360, %s361
      %p365 = pneg %p359
      %p366 = scmp.eq.s32.totalorder %s26, 3
      %p367 = por %p365, %p366
      %p368 = scmp.ne.s32.totalorder %s360, %s363
      %p369 = scmp.eq.s32.totalorder %s26, 0
      %p370 = por %p368, %p369
      %p371 = scmp.ne.s32.totalorder %s360, %s363
      %p372 = scmp.eq.s32.totalorder %s31, 3
      %p373 = por %p371, %p372
      %p374 = scmp.ne.s32.totalorder %s363, %s364
      %p375 = scmp.eq.s32.totalorder %s31, 0
      %p376 = por %p374, %p375
      %p377 = scmp.ne.s32.totalorder %s363, %s364
      %p378 = scmp.eq.s32.totalorder %s32, 3
      %p379 = por %p377, %p378
      %p381 = scmp.ne.s32.totalorder %s364, %s380
      %p382 = scmp.eq.s32.totalorder %s32, 0
      %p383 = por %p381, %p382
      %s384 = ssub.s32 %s34, %s41
      %p385 = scmp.eq.s32.totalorder %s384, 0
      %s387 = sadd.s32 %s386, 1
      %s388 = scalar_select %p385, %s386, %s387
      %p391 = pneg %p385
      %p392 = scmp.eq.s32.totalorder %s26, 3
      %p393 = por %p391, %p392
      %p394 = scmp.ne.s32.totalorder %s386, %s389
      %p395 = scmp.eq.s32.totalorder %s26, 0
      %p396 = por %p394, %p395
      %p397 = scmp.ne.s32.totalorder %s386, %s389
      %p398 = scmp.eq.s32.totalorder %s31, 3
      %p399 = por %p397, %p398
      %p400 = scmp.ne.s32.totalorder %s389, %s390
      %p401 = scmp.eq.s32.totalorder %s31, 0
      %p402 = por %p400, %p401
      %p403 = scmp.ne.s32.totalorder %s389, %s390
      %p404 = scmp.eq.s32.totalorder %s32, 3
      %p405 = por %p403, %p404
      %p407 = scmp.ne.s32.totalorder %s390, %s406
      %p408 = scmp.eq.s32.totalorder %s32, 0
      %p409 = por %p407, %p408
      %s410 = ssub.s32 %s34, %s41
      %p411 = scmp.eq.s32.totalorder %s410, 0
      %s413 = sadd.s32 %s412, 1
      %s414 = scalar_select %p411, %s412, %s413
      %p417 = pneg %p411
      %p418 = scmp.eq.s32.totalorder %s26, 3
      %p419 = por %p417, %p418
      %p420 = scmp.ne.s32.totalorder %s412, %s415
      %p421 = scmp.eq.s32.totalorder %s26, 0
      %p422 = por %p420, %p421
      %p423 = scmp.ne.s32.totalorder %s412, %s415
      %p424 = scmp.eq.s32.totalorder %s31, 3
      %p425 = por %p423, %p424
      %p426 = scmp.ne.s32.totalorder %s415, %s416
      %p427 = scmp.eq.s32.totalorder %s31, 0
      %p428 = por %p426, %p427
      %p429 = scmp.ne.s32.totalorder %s415, %s416
      %p430 = scmp.eq.s32.totalorder %s32, 3
      %p431 = por %p429, %p430
      %p433 = scmp.ne.s32.totalorder %s416, %s432
      %p434 = scmp.eq.s32.totalorder %s32, 0
      %p435 = por %p433, %p434
      %s436 = ssub.s32 %s34, %s41
      %p437 = scmp.eq.s32.totalorder %s436, 0
      %s439 = sadd.s32 %s438, 1
      %s440 = scalar_select %p437, %s438, %s439
      %p443 = pneg %p437
      %p444 = scmp.eq.s32.totalorder %s26, 3
      %p445 = por %p443, %p444
      %p446 = scmp.ne.s32.totalorder %s438, %s441
      %p447 = scmp.eq.s32.totalorder %s26, 0
      %p448 = por %p446, %p447
      %p449 = scmp.ne.s32.totalorder %s438, %s441
      %p450 = scmp.eq.s32.totalorder %s31, 3
      %p451 = por %p449, %p450
      %p452 = scmp.ne.s32.totalorder %s441, %s442
      %p453 = scmp.eq.s32.totalorder %s31, 0
      %p454 = por %p452, %p453
      %p455 = scmp.ne.s32.totalorder %s441, %s442
      %p456 = scmp.eq.s32.totalorder %s32, 3
      %p457 = por %p455, %p456
      %p459 = scmp.ne.s32.totalorder %s442, %s458
      %p460 = scmp.eq.s32.totalorder %s32, 0
      %p461 = por %p459, %p460
      %s462 = ssub.s32 %s34, %s41
      %p463 = scmp.eq.s32.totalorder %s462, 0
      %s465 = sadd.s32 %s464, 1
      %s466 = scalar_select %p463, %s464, %s465
      %p469 = pneg %p463
      %p470 = scmp.eq.s32.totalorder %s26, 3
      %p471 = por %p469, %p470
      %p472 = scmp.ne.s32.totalorder %s464, %s467
      %p473 = scmp.eq.s32.totalorder %s26, 0
      %p474 = por %p472, %p473
      %p475 = scmp.ne.s32.totalorder %s464, %s467
      %p476 = scmp.eq.s32.totalorder %s31, 3
      %p477 = por %p475, %p476
      %p478 = scmp.ne.s32.totalorder %s467, %s468
      %p479 = scmp.eq.s32.totalorder %s31, 0
      %p480 = por %p478, %p479
      %p481 = scmp.ne.s32.totalorder %s467, %s468
      %p482 = scmp.eq.s32.totalorder %s32, 3
      %p483 = por %p481, %p482
      %p485 = scmp.ne.s32.totalorder %s468, %s484
      %p486 = scmp.eq.s32.totalorder %s32, 0
      %p487 = por %p485, %p486
      %s488 = ssub.s32 %s33, %s45
      %p489 = scmp.eq.s32.totalorder %s488, 0
      %s491 = sadd.s32 %s490, 1
      %s492 = scalar_select %p489, %s490, %s491
      %p495 = pneg %p489
      %p496 = scmp.eq.s32.totalorder %s26, 3
      %p497 = por %p495, %p496
      %p498 = scmp.ne.s32.totalorder %s490, %s493
      %p499 = scmp.eq.s32.totalorder %s26, 0
      %p500 = por %p498, %p499
      %p501 = scmp.ne.s32.totalorder %s490, %s493
      %p502 = scmp.eq.s32.totalorder %s31, 3
      %p503 = por %p501, %p502
      %p504 = scmp.ne.s32.totalorder %s493, %s494
      %p505 = scmp.eq.s32.totalorder %s31, 0
      %p506 = por %p504, %p505
      %p507 = scmp.ne.s32.totalorder %s493, %s494
      %p508 = scmp.eq.s32.totalorder %s32, 3
      %p509 = por %p507, %p508
      %p511 = scmp.ne.s32.totalorder %s494, %s510
      %p512 = scmp.eq.s32.totalorder %s32, 0
      %p513 = por %p511, %p512
      %p514 = scmp.le.s32.totalorder 1, %s26
      %p515 = scmp.lt.s32.totalorder %s26, 5
      %p516 = pnand %p514, %p515
      %p517 = pneg %p516
      // Predicated region
      $region9: #{tpu_custom_call.1} parent=5 // pred_check
        _
      $region10: #{tpu_custom_call.1} parent=5 // pred_check_branch
        %519 = sbr.rel (%p516) target = $region12
      $region11: #{tpu_custom_call.1} parent=5 // pred_region
        %s520 = ssub.s32 %s26, 1
      $region12: #{tpu_custom_call.1} parent=5 // pred_fallthru
        _
      %p521 = scmp.lt.s32.totalorder %s26, 4
      // Predicated region
      $region13: #{tpu_custom_call.1} parent=5 // pred_check
        %p522 = pneg %p521
      $region14: #{tpu_custom_call.1} parent=5 // pred_check_branch
        %524 = sbr.rel (%p522) target = $region16
      $region15: #{tpu_custom_call.1} parent=5 // pred_region
        // Predicated region
        $region17: #{tpu_custom_call.1} parent=15 // pred_check
          %p525 = pneg %p58
        $region18: #{tpu_custom_call.1} parent=15 // pred_check_branch
          %527 = sbr.rel (%p525) target = $region20
        $region19: #{tpu_custom_call.1} parent=15 // pred_region
          %p528 = scmp.lt.s32.totalorder %s33, 1
          %s529 = scalar_select %p528, %s33, 1
          %s530 = smul.addr %s529, 8
          %s531 = scalar_lea.vmem %s0, %s530
        $region20: #{tpu_custom_call.1} parent=15 // pred_fallthru
          _
        // Predicated region
        $region21: #{tpu_custom_call.1} parent=15 // pred_check
          %p532 = pneg %p84
        $region22: #{tpu_custom_call.1} parent=15 // pred_check_branch
          %534 = sbr.rel (%p532) target = $region24
        $region23: #{tpu_custom_call.1} parent=15 // pred_region
          %p535 = scmp.lt.s32.totalorder %s34, 1
          %s536 = scalar_select %p535, %s34, 1
          %s537 = smul.addr %s536, 16
          %s538 = smul.addr %s537, 4
          %s539 = scalar_lea.vmem %s1, %s538
        $region24: #{tpu_custom_call.1} parent=15 // pred_fallthru
          _
        // Predicated region
        $region25: #{tpu_custom_call.1} parent=15 // pred_check
          %p540 = pneg %p110
        $region26: #{tpu_custom_call.1} parent=15 // pred_check_branch
          %542 = sbr.rel (%p540) target = $region28
        $region27: #{tpu_custom_call.1} parent=15 // pred_region
          %p543 = scmp.lt.s32.totalorder %s34, 1
          %s544 = scalar_select %p543, %s34, 1
          %s545 = smul.addr %s544, 16
          %s546 = smul.addr %s545, 4
          %s547 = scalar_lea.vmem %s2, %s546
        $region28: #{tpu_custom_call.1} parent=15 // pred_fallthru
          _
        // Predicated region
        $region29: #{tpu_custom_call.1} parent=15 // pred_check
          %p548 = pneg %p136
        $region30: #{tpu_custom_call.1} parent=15 // pred_check_branch
          %550 = sbr.rel (%p548) target = $region32
        $region31: #{tpu_custom_call.1} parent=15 // pred_region
          %p551 = scmp.lt.s32.totalorder %s34, 1
          %s552 = scalar_select %p551, %s34, 1
          %s553 = smul.addr %s552, 16
          %s554 = smul.addr %s553, 4
          %s555 = scalar_lea.vmem %s3, %s554
        $region32: #{tpu_custom_call.1} parent=15 // pred_fallthru
          _
        // Predicated region
        $region33: #{tpu_custom_call.1} parent=15 // pred_check
          %p556 = pneg %p162
        $region34: #{tpu_custom_call.1} parent=15 // pred_check_branch
          %558 = sbr.rel (%p556) target = $region36
        $region35: #{tpu_custom_call.1} parent=15 // pred_region
          %p559 = scmp.lt.s32.totalorder %s34, 1
          %s560 = scalar_select %p559, %s34, 1
          %s561 = smul.addr %s560, 2
          %s562 = scalar_lea.vmem %s4, %s561
        $region36: #{tpu_custom_call.1} parent=15 // pred_fallthru
          _
        // Predicated region
        $region37: #{tpu_custom_call.1} parent=15 // pred_check
          %p563 = pneg %p188
        $region38: #{tpu_custom_call.1} parent=15 // pred_check_branch
          %565 = sbr.rel (%p563) target = $region40
        $region39: #{tpu_custom_call.1} parent=15 // pred_region
          %p566 = scmp.lt.s32.totalorder %s34, 1
          %s567 = scalar_select %p566, %s34, 1
          %s568 = smul.addr %s567, 2
          %s569 = scalar_lea.vmem %s5, %s568
        $region40: #{tpu_custom_call.1} parent=15 // pred_fallthru
          _
        // Predicated region
        $region41: #{tpu_custom_call.1} parent=15 // pred_check
          %p570 = pneg %p214
        $region42: #{tpu_custom_call.1} parent=15 // pred_check_branch
          %572 = sbr.rel (%p570) target = $region44
        $region43: #{tpu_custom_call.1} parent=15 // pred_region
          %p573 = scmp.lt.s32.totalorder %s34, 1
          %s574 = scalar_select %p573, %s34, 1
          %s575 = smul.addr %s574, 2
          %s576 = scalar_lea.vmem %s6, %s575
        $region44: #{tpu_custom_call.1} parent=15 // pred_fallthru
          _
        // Predicated region
        $region45: #{tpu_custom_call.1} parent=15 // pred_check
          %p577 = pneg %p240
        $region46: #{tpu_custom_call.1} parent=15 // pred_check_branch
          %579 = sbr.rel (%p577) target = $region48
        $region47: #{tpu_custom_call.1} parent=15 // pred_region
          %p580 = scmp.lt.s32.totalorder %s34, 1
          %s581 = scalar_select %p580, %s34, 1
          %s582 = smul.addr %s581, 8
          %s583 = smul.addr %s582, 4
          %s584 = scalar_lea.vmem %s7, %s583
        $region48: #{tpu_custom_call.1} parent=15 // pred_fallthru
          _
        // Predicated region
        $region49: #{tpu_custom_call.1} parent=15 // pred_check
          %p585 = pneg %p266
        $region50: #{tpu_custom_call.1} parent=15 // pred_check_branch
          %587 = sbr.rel (%p585) target = $region52
        $region51: #{tpu_custom_call.1} parent=15 // pred_region
          %p588 = scmp.lt.s32.totalorder %s34, 1
          %s589 = scalar_select %p588, %s34, 1
          %s590 = scalar_lea.vmem %s8, %s589
        $region52: #{tpu_custom_call.1} parent=15 // pred_fallthru
          _
        // Predicated region
        $region53: #{tpu_custom_call.1} parent=15 // pred_check
          %p591 = pneg %p292
        $region54: #{tpu_custom_call.1} parent=15 // pred_check_branch
          %593 = sbr.rel (%p591) target = $region56
        $region55: #{tpu_custom_call.1} parent=15 // pred_region
          %p594 = scmp.lt.s32.totalorder %s34, 1
          %s595 = scalar_select %p594, %s34, 1
          %s596 = scalar_lea.vmem %s9, %s595
        $region56: #{tpu_custom_call.1} parent=15 // pred_fallthru
          _
        // Predicated region
        $region57: #{tpu_custom_call.1} parent=15 // pred_check
          %p597 = pneg %p318
        $region58: #{tpu_custom_call.1} parent=15 // pred_check_branch
          %599 = sbr.rel (%p597) target = $region60
        $region59: #{tpu_custom_call.1} parent=15 // pred_region
          %p600 = scmp.lt.s32.totalorder %s34, 1
          %s601 = scalar_select %p600, %s34, 1
          %s602 = scalar_lea.vmem %s10, %s601
        $region60: #{tpu_custom_call.1} parent=15 // pred_fallthru
          _
        // Predicated region
        $region61: #{tpu_custom_call.1} parent=15 // pred_check
          %p603 = pneg %p344
        $region62: #{tpu_custom_call.1} parent=15 // pred_check_branch
          %605 = sbr.rel (%p603) target = $region64
        $region63: #{tpu_custom_call.1} parent=15 // pred_region
          %p606 = scmp.lt.s32.totalorder %s34, 1
          %s607 = scalar_select %p606, %s34, 1
          %s608 = smul.addr %s607, 8
          %s609 = smul.addr %s608, 4
          %s610 = scalar_lea.vmem %s11, %s609
        $region64: #{tpu_custom_call.1} parent=15 // pred_fallthru
          _
        // Predicated region
        $region65: #{tpu_custom_call.1} parent=15 // pred_check
          %p611 = pneg %p370
        $region66: #{tpu_custom_call.1} parent=15 // pred_check_branch
          %613 = sbr.rel (%p611) target = $region68
        $region67: #{tpu_custom_call.1} parent=15 // pred_region
          %p614 = scmp.lt.s32.totalorder %s34, 1
          %s615 = scalar_select %p614, %s34, 1
          %s616 = scalar_lea.vmem %s12, %s615
        $region68: #{tpu_custom_call.1} parent=15 // pred_fallthru
          _
        // Predicated region
        $region69: #{tpu_custom_call.1} parent=15 // pred_check
          %p617 = pneg %p396
        $region70: #{tpu_custom_call.1} parent=15 // pred_check_branch
          %619 = sbr.rel (%p617) target = $region72
        $region71: #{tpu_custom_call.1} parent=15 // pred_region
          %p620 = scmp.lt.s32.totalorder %s34, 1
          %s621 = scalar_select %p620, %s34, 1
          %s622 = smul.addr %s621, 16
          %s623 = smul.addr %s622, 4
          %s624 = scalar_lea.vmem %s13, %s623
        $region72: #{tpu_custom_call.1} parent=15 // pred_fallthru
          _
        // Predicated region
        $region73: #{tpu_custom_call.1} parent=15 // pred_check
          %p625 = pneg %p422
        $region74: #{tpu_custom_call.1} parent=15 // pred_check_branch
          %627 = sbr.rel (%p625) target = $region76
        $region75: #{tpu_custom_call.1} parent=15 // pred_region
          %p628 = scmp.lt.s32.totalorder %s34, 1
          %s629 = scalar_select %p628, %s34, 1
          %s630 = scalar_lea.vmem %s14, %s629
        $region76: #{tpu_custom_call.1} parent=15 // pred_fallthru
          _
        // Predicated region
        $region77: #{tpu_custom_call.1} parent=15 // pred_check
          %p631 = pneg %p448
        $region78: #{tpu_custom_call.1} parent=15 // pred_check_branch
          %633 = sbr.rel (%p631) target = $region80
        $region79: #{tpu_custom_call.1} parent=15 // pred_region
          %p634 = scmp.lt.s32.totalorder %s34, 1
          %s635 = scalar_select %p634, %s34, 1
          %s636 = scalar_lea.vmem %s15, %s635
        $region80: #{tpu_custom_call.1} parent=15 // pred_fallthru
          _
        // Predicated region
        $region81: #{tpu_custom_call.1} parent=15 // pred_check
          %p637 = pneg %p474
        $region82: #{tpu_custom_call.1} parent=15 // pred_check_branch
          %639 = sbr.rel (%p637) target = $region84
        $region83: #{tpu_custom_call.1} parent=15 // pred_region
          %p640 = scmp.lt.s32.totalorder %s34, 1
          %s641 = scalar_select %p640, %s34, 1
          %s642 = scalar_lea.vmem %s16, %s641
        $region84: #{tpu_custom_call.1} parent=15 // pred_fallthru
          _
      $region16: #{tpu_custom_call.1} parent=5 // pred_fallthru
        _
      %p643 = scmp.le.s32.totalorder 1, %s26
      %p644 = scmp.lt.s32.totalorder %s26, 5
      %p645 = pnand %p643, %p644
      %p646 = pneg %p645
      // Predicated region
      $region85: #{tpu_custom_call.1} parent=5 // pred_check
        _
      $region86: #{tpu_custom_call.1} parent=5 // pred_check_branch
        %648 = sbr.rel (%p645) target = $region88
      $region87: #{tpu_custom_call.1} parent=5 // pred_region
        %s649 = ssub.s32 %s26, 1
        %p650 = scmp.lt.s32.totalorder %s35, 1
        %s651 = scalar_select %p650, %s35, 1
        %s652 = smul.addr %s651, 8
        %s653 = scalar_lea.vmem %s0, %s652
        %p654 = pneg %p64
        %p655 = pneg %p61
        %p656 = scmp.lt.s32.totalorder %s36, 1
        %s657 = scalar_select %p656, %s36, 1
        %s658 = smul.addr %s657, 16
        %s659 = smul.addr %s658, 4
        %s660 = scalar_lea.vmem %s1, %s659
        %p661 = pneg %p90
        %p662 = pneg %p87
        %p663 = scmp.lt.s32.totalorder %s36, 1
        %s664 = scalar_select %p663, %s36, 1
        %s665 = smul.addr %s664, 16
        %s666 = smul.addr %s665, 4
        %s667 = scalar_lea.vmem %s2, %s666
        %p668 = pneg %p116
        %p669 = pneg %p113
        %p670 = scmp.lt.s32.totalorder %s36, 1
        %s671 = scalar_select %p670, %s36, 1
        %s672 = smul.addr %s671, 16
        %s673 = smul.addr %s672, 4
        %s674 = scalar_lea.vmem %s3, %s673
        %p675 = pneg %p142
        %p676 = pneg %p139
        %p677 = scmp.lt.s32.totalorder %s36, 1
        %s678 = scalar_select %p677, %s36, 1
        %s679 = smul.addr %s678, 2
        %s680 = scalar_lea.vmem %s4, %s679
        %p681 = pneg %p168
        %p682 = pneg %p165
        %p683 = scmp.lt.s32.totalorder %s36, 1
        %s684 = scalar_select %p683, %s36, 1
        %s685 = smul.addr %s684, 2
        %s686 = scalar_lea.vmem %s5, %s685
        %p687 = pneg %p194
        %p688 = pneg %p191
        %p689 = scmp.lt.s32.totalorder %s36, 1
        %s690 = scalar_select %p689, %s36, 1
        %s691 = smul.addr %s690, 2
        %s692 = scalar_lea.vmem %s6, %s691
        %p693 = pneg %p220
        %p694 = pneg %p217
        %p695 = scmp.lt.s32.totalorder %s36, 1
        %s696 = scalar_select %p695, %s36, 1
        %s697 = smul.addr %s696, 8
        %s698 = smul.addr %s697, 4
        %s699 = scalar_lea.vmem %s7, %s698
        %p700 = pneg %p246
        %p701 = pneg %p243
        %p702 = scmp.lt.s32.totalorder %s36, 1
        %s703 = scalar_select %p702, %s36, 1
        %s704 = scalar_lea.vmem %s8, %s703
        %p705 = pneg %p272
        %p706 = pneg %p269
        %p707 = scmp.lt.s32.totalorder %s36, 1
        %s708 = scalar_select %p707, %s36, 1
        %s709 = scalar_lea.vmem %s9, %s708
        %p710 = pneg %p298
        %p711 = pneg %p295
        %p712 = scmp.lt.s32.totalorder %s36, 1
        %s713 = scalar_select %p712, %s36, 1
        %s714 = scalar_lea.vmem %s10, %s713
        %p715 = pneg %p324
        %p716 = pneg %p321
        %p717 = scmp.lt.s32.totalorder %s36, 1
        %s718 = scalar_select %p717, %s36, 1
        %s719 = smul.addr %s718, 8
        %s720 = smul.addr %s719, 4
        %s721 = scalar_lea.vmem %s11, %s720
        %p722 = pneg %p350
        %p723 = pneg %p347
        %p724 = scmp.lt.s32.totalorder %s36, 1
        %s725 = scalar_select %p724, %s36, 1
        %s726 = scalar_lea.vmem %s12, %s725
        %p727 = pneg %p376
        %p728 = pneg %p373
        %p729 = scmp.lt.s32.totalorder %s36, 1
        %s730 = scalar_select %p729, %s36, 1
        %s731 = smul.addr %s730, 16
        %s732 = smul.addr %s731, 4
        %s733 = scalar_lea.vmem %s13, %s732
        %p734 = pneg %p402
        %p735 = pneg %p399
        %p736 = scmp.lt.s32.totalorder %s36, 1
        %s737 = scalar_select %p736, %s36, 1
        %s738 = scalar_lea.vmem %s14, %s737
        %p739 = pneg %p428
        %p740 = pneg %p425
        %p741 = scmp.lt.s32.totalorder %s36, 1
        %s742 = scalar_select %p741, %s36, 1
        %s743 = scalar_lea.vmem %s15, %s742
        %p744 = pneg %p454
        %p745 = pneg %p451
        %p746 = scmp.lt.s32.totalorder %s36, 1
        %s747 = scalar_select %p746, %s36, 1
        %s748 = scalar_lea.vmem %s16, %s747
        %p749 = pneg %p480
        %p750 = pneg %p477
        %p751 = pneg %p506
        %p752 = pneg %p503
        %s753 = sand.u32 %s493, 1
        %s754 = scalar_lea.sflag [#allocation4], %s753
        %s755 = sand.u32 %s493, 1
        %s756 = smul.addr %s755, 8
        %s757 = scalar_lea.vmem [#allocation3], %s756
        %p758 = scmp.lt.s32.totalorder %s35, 1
        %s759 = scalar_select %p758, %s35, 1
        %s760 = smul.addr %s759, 8
        %s761 = scalar_lea.vmem %s0, %s760
        %p762 = scmp.lt.s32.totalorder %s36, 1
        %s763 = scalar_select %p762, %s36, 1
        %s764 = smul.addr %s763, 16
        %s765 = smul.addr %s764, 4
        %s766 = scalar_lea.vmem %s1, %s765
        %p767 = scmp.lt.s32.totalorder %s36, 1
        %s768 = scalar_select %p767, %s36, 1
        %s769 = smul.addr %s768, 16
        %s770 = smul.addr %s769, 4
        %s771 = scalar_lea.vmem %s2, %s770
        %p772 = scmp.lt.s32.totalorder %s36, 1
        %s773 = scalar_select %p772, %s36, 1
        %s774 = smul.addr %s773, 16
        %s775 = smul.addr %s774, 4
        %s776 = scalar_lea.vmem %s3, %s775
        %p777 = scmp.lt.s32.totalorder %s36, 1
        %s778 = scalar_select %p777, %s36, 1
        %s779 = smul.addr %s778, 2
        %s780 = scalar_lea.vmem %s4, %s779
        %p781 = scmp.lt.s32.totalorder %s36, 1
        %s782 = scalar_select %p781, %s36, 1
        %s783 = smul.addr %s782, 2
        %s784 = scalar_lea.vmem %s5, %s783
        %p785 = scmp.lt.s32.totalorder %s36, 1
        %s786 = scalar_select %p785, %s36, 1
        %s787 = smul.addr %s786, 2
        %s788 = scalar_lea.vmem %s6, %s787
        %p789 = scmp.lt.s32.totalorder %s36, 1
        %s790 = scalar_select %p789, %s36, 1
        %s791 = smul.addr %s790, 8
        %s792 = smul.addr %s791, 4
        %s793 = scalar_lea.vmem %s7, %s792
        %p794 = scmp.lt.s32.totalorder %s36, 1
        %s795 = scalar_select %p794, %s36, 1
        %s796 = scalar_lea.vmem %s8, %s795
        %p797 = scmp.lt.s32.totalorder %s36, 1
        %s798 = scalar_select %p797, %s36, 1
        %s799 = scalar_lea.vmem %s9, %s798
        %p800 = scmp.lt.s32.totalorder %s36, 1
        %s801 = scalar_select %p800, %s36, 1
        %s802 = scalar_lea.vmem %s10, %s801
        %p803 = scmp.lt.s32.totalorder %s36, 1
        %s804 = scalar_select %p803, %s36, 1
        %s805 = smul.addr %s804, 8
        %s806 = smul.addr %s805, 4
        %s807 = scalar_lea.vmem %s11, %s806
        %p808 = scmp.lt.s32.totalorder %s36, 1
        %s809 = scalar_select %p808, %s36, 1
        %s810 = scalar_lea.vmem %s12, %s809
        %p811 = scmp.lt.s32.totalorder %s36, 1
        %s812 = scalar_select %p811, %s36, 1
        %s813 = smul.addr %s812, 16
        %s814 = smul.addr %s813, 4
        %s815 = scalar_lea.vmem %s13, %s814
        %p816 = scmp.lt.s32.totalorder %s36, 1
        %s817 = scalar_select %p816, %s36, 1
        %s818 = scalar_lea.vmem %s14, %s817
        %p819 = scmp.lt.s32.totalorder %s36, 1
        %s820 = scalar_select %p819, %s36, 1
        %s821 = scalar_lea.vmem %s15, %s820
        %p822 = scmp.lt.s32.totalorder %s36, 1
        %s823 = scalar_select %p822, %s36, 1
        %s824 = scalar_lea.vmem %s16, %s823
        %p826 = scmp.eq.s32.totalorder %s36, 0
        // Predicated region
        $region89: #{tpu_custom_call.1} parent=87 // pred_check
          %p827 = pneg %p826
        $region90: #{tpu_custom_call.1} parent=87 // pred_check_branch
          %829 = sbr.rel (%p827) target = $region92
        $region91: #{tpu_custom_call.1} parent=87 // pred_region
          %v830 = vld [vmem:[%s761] sm:$0xff]
          %vm831 = vcmask 523264
          %832 = vst.msk [vmem:[#allocation2] sm:$0xff] %vm831, %v830
        $region92: #{tpu_custom_call.1} parent=87 // pred_fallthru
          _
        %v833 = vld [vmem:[#allocation2] sm:$0xff]
        %v834 = vpack.c.bf16 %v833, %v833
        %v835 = vld [vmem:[%s766] sm:$0xf]
        %v836 = vld [vmem:[%s766 + $0x4] sm:$0xf]
        %v837 = vld [vmem:[%s766 + $0x8] sm:$0xf]
        %v838 = vld [vmem:[%s766 + $0xc] sm:$0xf]
        %v839 = vld [vmem:[%s766 + $0x10] sm:$0xf]
        %v840 = vld [vmem:[%s766 + $0x14] sm:$0xf]
        %v841 = vld [vmem:[%s766 + $0x18] sm:$0xf]
        %v842 = vld [vmem:[%s766 + $0x1c] sm:$0xf]
        %v843 = vld [vmem:[%s766 + $0x20] sm:$0xf]
        %v844 = vld [vmem:[%s766 + $0x24] sm:$0xf]
        %v845 = vld [vmem:[%s766 + $0x28] sm:$0xf]
        %v846 = vld [vmem:[%s766 + $0x2c] sm:$0xf]
        %v847 = vld [vmem:[%s766 + $0x30] sm:$0xf]
        %v848 = vld [vmem:[%s766 + $0x34] sm:$0xf]
        %v849 = vld [vmem:[%s766 + $0x38] sm:$0xf]
        %v850 = vld [vmem:[%s766 + $0x3c] sm:$0xf]
        %v851 = vld [vmem:[%s780] sm:$0x1]
        %v852 = vld [vmem:[%s780 + $0x1] sm:$0x1]
        %v855 = vlaneseq
        %v856 = vshrl.u32 %v855, 7
        %v857 = vsub.s32 0, %v856
        %v858 = vrot.slane %v851, %v857
        %v859 = vlaneseq
        %v860 = vshrl.u32 %v859, 7
        %v861 = vsub.s32 0, %v860
        %v862 = vrot.slane %v852, %v861
        %v873 = vunpack.c.l.b16 %v835
        %v874 = vunpack.c.l.b16 %v836
        %v875 = vunpack.c.l.b16 %v837
        %v876 = vunpack.c.l.b16 %v838
        %v877 = vunpack.c.l.b16 %v839
        %v878 = vunpack.c.l.b16 %v840
        %v879 = vunpack.c.l.b16 %v841
        %v880 = vunpack.c.l.b16 %v842
        %v881 = vpack.c.b16 %v874, %v873
        %v882 = vpack.c.b16 %v876, %v875
        %v883 = vpack.c.b16 %v878, %v877
        %v884 = vpack.c.b16 %v880, %v879
        %vm889 = vcmask 523264
        %v891 = vsel %vm889, %v834, 0
        %893 = vmatprep.subr.bf16.mxu0 0
        %894 = vmatpush1.bf16.msra.mxu0 %v881
        %895 = vmatprep.subr.bf16.mxu0 0
        %896 = vmatpush1.bf16.msra.mxu0 %v882
        %897 = vmatprep.subr.bf16.mxu0 0
        %898 = vmatpush1.bf16.msra.mxu0 %v883
        %899 = vmatprep.subr.bf16.mxu0 0
        %900 = vmatpush1.bf16.msra.mxu0 %v884
        %901 = vmatprep.subr.bf16.mxu0 0
        %902 = vmatpush1.bf16.msra.mxu0 0
        %903 = vmatprep.subr.bf16.mxu0 0
        %904 = vmatpush1.bf16.msra.mxu0 0
        %905 = vmatprep.subr.bf16.mxu0 0
        %906 = vmatpush1.bf16.msra.mxu0 0
        %907 = vmatprep.subr.bf16.mxu0 0
        %908 = vmatpush1.bf16.msra.mxu0 0
        %909 = vmatprep.subr.bf16.mxu0 0
        %910 = vmatpush1.bf16.msra.mxu0 0
        %911 = vmatprep.subr.bf16.mxu0 0
        %912 = vmatpush1.bf16.msra.mxu0 0
        %913 = vmatprep.subr.bf16.mxu0 0
        %914 = vmatpush1.bf16.msra.mxu0 0
        %915 = vmatprep.subr.bf16.mxu0 0
        %916 = vmatpush1.bf16.msra.mxu0 0
        %917 = vmatprep.subr.bf16.mxu0 0
        %918 = vmatpush1.bf16.msra.mxu0 0
        %919 = vmatprep.subr.bf16.mxu0 0
        %920 = vmatpush1.bf16.msra.mxu0 0
        %921 = vmatprep.subr.bf16.mxu0 0
        %922 = vmatpush1.bf16.msra.mxu0 0
        %923 = vmatprep.subr.bf16.mxu0 0
        %924 = vmatpush1.bf16.msra.mxu0 0
        %925 = vmatprep.mubr.bf16.mxu0 0
        %926 = vmatmul.mubr.bf16.gmra.mrb[0].mxu0 %v891
        %v927 = vpop.f32.mrb[0].mxu0
        %v928 = vadd.f32 %v858, %v927
        %v929 = vpop.f32.mrb[0].mxu0
        %v930 = vpop.f32.mrb[0].mxu0
        %v931 = vpop.f32.mrb[0].mxu0
        %932 = vdwg.mxu0
        %v941 = vunpack.c.l.b16 %v843
        %v942 = vunpack.c.l.b16 %v844
        %v943 = vunpack.c.l.b16 %v845
        %v944 = vunpack.c.l.b16 %v846
        %v945 = vunpack.c.l.b16 %v847
        %v946 = vunpack.c.l.b16 %v848
        %v947 = vunpack.c.l.b16 %v849
        %v948 = vunpack.c.l.b16 %v850
        %v949 = vpack.c.b16 %v942, %v941
        %v950 = vpack.c.b16 %v944, %v943
        %v951 = vpack.c.b16 %v946, %v945
        %v952 = vpack.c.b16 %v948, %v947
        %957 = vmatprep.subr.bf16.mxu0 0
        %958 = vmatpush1.bf16.msra.mxu0 %v949
        %959 = vmatprep.subr.bf16.mxu0 0
        %960 = vmatpush1.bf16.msra.mxu0 %v950
        %961 = vmatprep.subr.bf16.mxu0 0
        %962 = vmatpush1.bf16.msra.mxu0 %v951
        %963 = vmatprep.subr.bf16.mxu0 0
        %964 = vmatpush1.bf16.msra.mxu0 %v952
        %965 = vmatprep.subr.bf16.mxu0 0
        %966 = vmatpush1.bf16.msra.mxu0 0
        %967 = vmatprep.subr.bf16.mxu0 0
        %968 = vmatpush1.bf16.msra.mxu0 0
        %969 = vmatprep.subr.bf16.mxu0 0
        %970 = vmatpush1.bf16.msra.mxu0 0
        %971 = vmatprep.subr.bf16.mxu0 0
        %972 = vmatpush1.bf16.msra.mxu0 0
        %973 = vmatprep.subr.bf16.mxu0 0
        %974 = vmatpush1.bf16.msra.mxu0 0
        %975 = vmatprep.subr.bf16.mxu0 0
        %976 = vmatpush1.bf16.msra.mxu0 0
        %977 = vmatprep.subr.bf16.mxu0 0
        %978 = vmatpush1.bf16.msra.mxu0 0
        %979 = vmatprep.subr.bf16.mxu0 0
        %980 = vmatpush1.bf16.msra.mxu0 0
        %981 = vmatprep.subr.bf16.mxu0 0
        %982 = vmatpush1.bf16.msra.mxu0 0
        %983 = vmatprep.subr.bf16.mxu0 0
        %984 = vmatpush1.bf16.msra.mxu0 0
        %985 = vmatprep.subr.bf16.mxu0 0
        %986 = vmatpush1.bf16.msra.mxu0 0
        %987 = vmatprep.subr.bf16.mxu0 0
        %988 = vmatpush1.bf16.msra.mxu0 0
        %989 = vmatprep.mubr.bf16.mxu0 0
        %990 = vmatmul.mubr.bf16.gmra.mrb[0].mxu0 %v891
        %v991 = vpop.f32.mrb[0].mxu0
        %v992 = vadd.f32 %v862, %v991
        %v993 = vpop.f32.mrb[0].mxu0
        %v994 = vpop.f32.mrb[0].mxu0
        %v995 = vpop.f32.mrb[0].mxu0
        %996 = vdwg.mxu0
        %v997 = vld [vmem:[%s771] sm:$0xf]
        %v998 = vld [vmem:[%s771 + $0x4] sm:$0xf]
        %v999 = vld [vmem:[%s771 + $0x8] sm:$0xf]
        %v1000 = vld [vmem:[%s771 + $0xc] sm:$0xf]
        %v1001 = vld [vmem:[%s771 + $0x10] sm:$0xf]
        %v1002 = vld [vmem:[%s771 + $0x14] sm:$0xf]
        %v1003 = vld [vmem:[%s771 + $0x18] sm:$0xf]
        %v1004 = vld [vmem:[%s771 + $0x1c] sm:$0xf]
        %v1005 = vld [vmem:[%s771 + $0x20] sm:$0xf]
        %v1006 = vld [vmem:[%s771 + $0x24] sm:$0xf]
        %v1007 = vld [vmem:[%s771 + $0x28] sm:$0xf]
        %v1008 = vld [vmem:[%s771 + $0x2c] sm:$0xf]
        %v1009 = vld [vmem:[%s771 + $0x30] sm:$0xf]
        %v1010 = vld [vmem:[%s771 + $0x34] sm:$0xf]
        %v1011 = vld [vmem:[%s771 + $0x38] sm:$0xf]
        %v1012 = vld [vmem:[%s771 + $0x3c] sm:$0xf]
        %v1013 = vld [vmem:[%s784] sm:$0x1]
        %v1014 = vld [vmem:[%s784 + $0x1] sm:$0x1]
        %v1017 = vlaneseq
        %v1018 = vshrl.u32 %v1017, 7
        %v1019 = vsub.s32 0, %v1018
        %v1020 = vrot.slane %v1013, %v1019
        %v1021 = vlaneseq
        %v1022 = vshrl.u32 %v1021, 7
        %v1023 = vsub.s32 0, %v1022
        %v1024 = vrot.slane %v1014, %v1023
        %v1035 = vunpack.c.l.b16 %v997
        %v1036 = vunpack.c.l.b16 %v998
        %v1037 = vunpack.c.l.b16 %v999
        %v1038 = vunpack.c.l.b16 %v1000
        %v1039 = vunpack.c.l.b16 %v1001
        %v1040 = vunpack.c.l.b16 %v1002
        %v1041 = vunpack.c.l.b16 %v1003
        %v1042 = vunpack.c.l.b16 %v1004
        %v1043 = vpack.c.b16 %v1036, %v1035
        %v1044 = vpack.c.b16 %v1038, %v1037
        %v1045 = vpack.c.b16 %v1040, %v1039
        %v1046 = vpack.c.b16 %v1042, %v1041
        %1051 = vmatprep.subr.bf16.mxu0 0
        %1052 = vmatpush1.bf16.msra.mxu0 %v1043
        %1053 = vmatprep.subr.bf16.mxu0 0
        %1054 = vmatpush1.bf16.msra.mxu0 %v1044
        %1055 = vmatprep.subr.bf16.mxu0 0
        %1056 = vmatpush1.bf16.msra.mxu0 %v1045
        %1057 = vmatprep.subr.bf16.mxu0 0
        %1058 = vmatpush1.bf16.msra.mxu0 %v1046
        %1059 = vmatprep.subr.bf16.mxu0 0
        %1060 = vmatpush1.bf16.msra.mxu0 0
        %1061 = vmatprep.subr.bf16.mxu0 0
        %1062 = vmatpush1.bf16.msra.mxu0 0
        %1063 = vmatprep.subr.bf16.mxu0 0
        %1064 = vmatpush1.bf16.msra.mxu0 0
        %1065 = vmatprep.subr.bf16.mxu0 0
        %1066 = vmatpush1.bf16.msra.mxu0 0
        %1067 = vmatprep.subr.bf16.mxu0 0
        %1068 = vmatpush1.bf16.msra.mxu0 0
        %1069 = vmatprep.subr.bf16.mxu0 0
        %1070 = vmatpush1.bf16.msra.mxu0 0
        %1071 = vmatprep.subr.bf16.mxu0 0
        %1072 = vmatpush1.bf16.msra.mxu0 0
        %1073 = vmatprep.subr.bf16.mxu0 0
        %1074 = vmatpush1.bf16.msra.mxu0 0
        %1075 = vmatprep.subr.bf16.mxu0 0
        %1076 = vmatpush1.bf16.msra.mxu0 0
        %1077 = vmatprep.subr.bf16.mxu0 0
        %1078 = vmatpush1.bf16.msra.mxu0 0
        %1079 = vmatprep.subr.bf16.mxu0 0
        %1080 = vmatpush1.bf16.msra.mxu0 0
        %1081 = vmatprep.subr.bf16.mxu0 0
        %1082 = vmatpush1.bf16.msra.mxu0 0
        %1083 = vmatprep.mubr.bf16.mxu0 0
        %1084 = vmatmul.mubr.bf16.gmra.mrb[0].mxu0 %v891
        %v1085 = vpop.f32.mrb[0].mxu0
        %v1086 = vadd.f32 %v1020, %v1085
        %v1087 = vpop.f32.mrb[0].mxu0
        %v1088 = vpop.f32.mrb[0].mxu0
        %v1089 = vpop.f32.mrb[0].mxu0
        %1090 = vdwg.mxu0
        %v1099 = vunpack.c.l.b16 %v1005
        %v1100 = vunpack.c.l.b16 %v1006
        %v1101 = vunpack.c.l.b16 %v1007
        %v1102 = vunpack.c.l.b16 %v1008
        %v1103 = vunpack.c.l.b16 %v1009
        %v1104 = vunpack.c.l.b16 %v1010
        %v1105 = vunpack.c.l.b16 %v1011
        %v1106 = vunpack.c.l.b16 %v1012
        %v1107 = vpack.c.b16 %v1100, %v1099
        %v1108 = vpack.c.b16 %v1102, %v1101
        %v1109 = vpack.c.b16 %v1104, %v1103
        %v1110 = vpack.c.b16 %v1106, %v1105
        %1115 = vmatprep.subr.bf16.mxu0 0
        %1116 = vmatpush1.bf16.msra.mxu0 %v1107
        %1117 = vmatprep.subr.bf16.mxu0 0
        %1118 = vmatpush1.bf16.msra.mxu0 %v1108
        %1119 = vmatprep.subr.bf16.mxu0 0
        %1120 = vmatpush1.bf16.msra.mxu0 %v1109
        %1121 = vmatprep.subr.bf16.mxu0 0
        %1122 = vmatpush1.bf16.msra.mxu0 %v1110
        %1123 = vmatprep.subr.bf16.mxu0 0
        %1124 = vmatpush1.bf16.msra.mxu0 0
        %1125 = vmatprep.subr.bf16.mxu0 0
        %1126 = vmatpush1.bf16.msra.mxu0 0
        %1127 = vmatprep.subr.bf16.mxu0 0
        %1128 = vmatpush1.bf16.msra.mxu0 0
        %1129 = vmatprep.subr.bf16.mxu0 0
        %1130 = vmatpush1.bf16.msra.mxu0 0
        %1131 = vmatprep.subr.bf16.mxu0 0
        %1132 = vmatpush1.bf16.msra.mxu0 0
        %1133 = vmatprep.subr.bf16.mxu0 0
        %1134 = vmatpush1.bf16.msra.mxu0 0
        %1135 = vmatprep.subr.bf16.mxu0 0
        %1136 = vmatpush1.bf16.msra.mxu0 0
        %1137 = vmatprep.subr.bf16.mxu0 0
        %1138 = vmatpush1.bf16.msra.mxu0 0
        %1139 = vmatprep.subr.bf16.mxu0 0
        %1140 = vmatpush1.bf16.msra.mxu0 0
        %1141 = vmatprep.subr.bf16.mxu0 0
        %1142 = vmatpush1.bf16.msra.mxu0 0
        %1143 = vmatprep.subr.bf16.mxu0 0
        %1144 = vmatpush1.bf16.msra.mxu0 0
        %1145 = vmatprep.subr.bf16.mxu0 0
        %1146 = vmatpush1.bf16.msra.mxu0 0
        %1147 = vmatprep.mubr.bf16.mxu0 0
        %1148 = vmatmul.mubr.bf16.gmra.mrb[0].mxu0 %v891
        %v1149 = vpop.f32.mrb[0].mxu0
        %v1150 = vadd.f32 %v1024, %v1149
        %v1151 = vpop.f32.mrb[0].mxu0
        %v1152 = vpop.f32.mrb[0].mxu0
        %v1153 = vpop.f32.mrb[0].mxu0
        %1154 = vdwg.mxu0
        %v1155 = vld [vmem:[%s776] sm:$0xf]
        %v1156 = vld [vmem:[%s776 + $0x4] sm:$0xf]
        %v1157 = vld [vmem:[%s776 + $0x8] sm:$0xf]
        %v1158 = vld [vmem:[%s776 + $0xc] sm:$0xf]
        %v1159 = vld [vmem:[%s776 + $0x10] sm:$0xf]
        %v1160 = vld [vmem:[%s776 + $0x14] sm:$0xf]
        %v1161 = vld [vmem:[%s776 + $0x18] sm:$0xf]
        %v1162 = vld [vmem:[%s776 + $0x1c] sm:$0xf]
        %v1163 = vld [vmem:[%s776 + $0x20] sm:$0xf]
        %v1164 = vld [vmem:[%s776 + $0x24] sm:$0xf]
        %v1165 = vld [vmem:[%s776 + $0x28] sm:$0xf]
        %v1166 = vld [vmem:[%s776 + $0x2c] sm:$0xf]
        %v1167 = vld [vmem:[%s776 + $0x30] sm:$0xf]
        %v1168 = vld [vmem:[%s776 + $0x34] sm:$0xf]
        %v1169 = vld [vmem:[%s776 + $0x38] sm:$0xf]
        %v1170 = vld [vmem:[%s776 + $0x3c] sm:$0xf]
        %v1171 = vld [vmem:[%s788] sm:$0x1]
        %v1172 = vld [vmem:[%s788 + $0x1] sm:$0x1]
        %v1175 = vlaneseq
        %v1176 = vshrl.u32 %v1175, 7
        %v1177 = vsub.s32 0, %v1176
        %v1178 = vrot.slane %v1171, %v1177
        %v1179 = vlaneseq
        %v1180 = vshrl.u32 %v1179, 7
        %v1181 = vsub.s32 0, %v1180
        %v1182 = vrot.slane %v1172, %v1181
        %v1193 = vunpack.c.l.b16 %v1155
        %v1194 = vunpack.c.l.b16 %v1156
        %v1195 = vunpack.c.l.b16 %v1157
        %v1196 = vunpack.c.l.b16 %v1158
        %v1197 = vunpack.c.l.b16 %v1159
        %v1198 = vunpack.c.l.b16 %v1160
        %v1199 = vunpack.c.l.b16 %v1161
        %v1200 = vunpack.c.l.b16 %v1162
        %v1201 = vpack.c.b16 %v1194, %v1193
        %v1202 = vpack.c.b16 %v1196, %v1195
        %v1203 = vpack.c.b16 %v1198, %v1197
        %v1204 = vpack.c.b16 %v1200, %v1199
        %1209 = vmatprep.subr.bf16.mxu0 0
        %1210 = vmatpush1.bf16.msra.mxu0 %v1201
        %1211 = vmatprep.subr.bf16.mxu0 0
        %1212 = vmatpush1.bf16.msra.mxu0 %v1202
        %1213 = vmatprep.subr.bf16.mxu0 0
        %1214 = vmatpush1.bf16.msra.mxu0 %v1203
        %1215 = vmatprep.subr.bf16.mxu0 0
        %1216 = vmatpush1.bf16.msra.mxu0 %v1204
        %1217 = vmatprep.subr.bf16.mxu0 0
        %1218 = vmatpush1.bf16.msra.mxu0 0
        %1219 = vmatprep.subr.bf16.mxu0 0
        %1220 = vmatpush1.bf16.msra.mxu0 0
        %1221 = vmatprep.subr.bf16.mxu0 0
        %1222 = vmatpush1.bf16.msra.mxu0 0
        %1223 = vmatprep.subr.bf16.mxu0 0
        %1224 = vmatpush1.bf16.msra.mxu0 0
        %1225 = vmatprep.subr.bf16.mxu0 0
        %1226 = vmatpush1.bf16.msra.mxu0 0
        %1227 = vmatprep.subr.bf16.mxu0 0
        %1228 = vmatpush1.bf16.msra.mxu0 0
        %1229 = vmatprep.subr.bf16.mxu0 0
        %1230 = vmatpush1.bf16.msra.mxu0 0
        %1231 = vmatprep.subr.bf16.mxu0 0
        %1232 = vmatpush1.bf16.msra.mxu0 0
        %1233 = vmatprep.subr.bf16.mxu0 0
        %1234 = vmatpush1.bf16.msra.mxu0 0
        %1235 = vmatprep.subr.bf16.mxu0 0
        %1236 = vmatpush1.bf16.msra.mxu0 0
        %1237 = vmatprep.subr.bf16.mxu0 0
        %1238 = vmatpush1.bf16.msra.mxu0 0
        %1239 = vmatprep.subr.bf16.mxu0 0
        %1240 = vmatpush1.bf16.msra.mxu0 0
        %1241 = vmatprep.mubr.bf16.mxu0 0
        %1242 = vmatmul.mubr.bf16.gmra.mrb[0].mxu0 %v891
        %v1243 = vpop.f32.mrb[0].mxu0
        %v1244 = vadd.f32 %v1178, %v1243
        %v1245 = vpop.f32.mrb[0].mxu0
        %v1246 = vpop.f32.mrb[0].mxu0
        %v1247 = vpop.f32.mrb[0].mxu0
        %1248 = vdwg.mxu0
        %v1257 = vunpack.c.l.b16 %v1163
        %v1258 = vunpack.c.l.b16 %v1164
        %v1259 = vunpack.c.l.b16 %v1165
        %v1260 = vunpack.c.l.b16 %v1166
        %v1261 = vunpack.c.l.b16 %v1167
        %v1262 = vunpack.c.l.b16 %v1168
        %v1263 = vunpack.c.l.b16 %v1169
        %v1264 = vunpack.c.l.b16 %v1170
        %v1265 = vpack.c.b16 %v1258, %v1257
        %v1266 = vpack.c.b16 %v1260, %v1259
        %v1267 = vpack.c.b16 %v1262, %v1261
        %v1268 = vpack.c.b16 %v1264, %v1263
        %1273 = vmatprep.subr.bf16.mxu0 0
        %1274 = vmatpush1.bf16.msra.mxu0 %v1265
        %1275 = vmatprep.subr.bf16.mxu0 0
        %1276 = vmatpush1.bf16.msra.mxu0 %v1266
        %1277 = vmatprep.subr.bf16.mxu0 0
        %1278 = vmatpush1.bf16.msra.mxu0 %v1267
        %1279 = vmatprep.subr.bf16.mxu0 0
        %1280 = vmatpush1.bf16.msra.mxu0 %v1268
        %1281 = vmatprep.subr.bf16.mxu0 0
        %1282 = vmatpush1.bf16.msra.mxu0 0
        %1283 = vmatprep.subr.bf16.mxu0 0
        %1284 = vmatpush1.bf16.msra.mxu0 0
        %1285 = vmatprep.subr.bf16.mxu0 0
        %1286 = vmatpush1.bf16.msra.mxu0 0
        %1287 = vmatprep.subr.bf16.mxu0 0
        %1288 = vmatpush1.bf16.msra.mxu0 0
        %1289 = vmatprep.subr.bf16.mxu0 0
        %1290 = vmatpush1.bf16.msra.mxu0 0
        %1291 = vmatprep.subr.bf16.mxu0 0
        %1292 = vmatpush1.bf16.msra.mxu0 0
        %1293 = vmatprep.subr.bf16.mxu0 0
        %1294 = vmatpush1.bf16.msra.mxu0 0
        %1295 = vmatprep.subr.bf16.mxu0 0
        %1296 = vmatpush1.bf16.msra.mxu0 0
        %1297 = vmatprep.subr.bf16.mxu0 0
        %1298 = vmatpush1.bf16.msra.mxu0 0
        %1299 = vmatprep.subr.bf16.mxu0 0
        %1300 = vmatpush1.bf16.msra.mxu0 0
        %1301 = vmatprep.subr.bf16.mxu0 0
        %1302 = vmatpush1.bf16.msra.mxu0 0
        %1303 = vmatprep.subr.bf16.mxu0 0
        %1304 = vmatpush1.bf16.msra.mxu0 0
        %1305 = vmatprep.mubr.bf16.mxu0 0
        %1306 = vmatmul.mubr.bf16.gmra.mrb[0].mxu0 %v891
        %v1307 = vpop.f32.mrb[0].mxu0
        %v1308 = vadd.f32 %v1182, %v1307
        %v1309 = vpop.f32.mrb[0].mxu0
        %v1310 = vpop.f32.mrb[0].mxu0
        %v1311 = vpop.f32.mrb[0].mxu0
        %1312 = vdwg.mxu0
        %v1313 = vpack.c.bf16 %v928, %v928
        %v1314 = vpack.c.bf16 %v992, %v992
        %v1315 = vpack.c.bf16 %v1086, %v1086
        %v1316 = vpack.c.bf16 %v1150, %v1150
        %vm1317 = vcmask 261120
        %v1319 = vsel %vm1317, %v1313, 0
        %v1322 = vsel %vm1317, %v1315, 0
        %1324 = vmatprep.subr.bf16.mxu0 0
        %1325 = vmatpush1.bf16.xpose.msra.mxu0 %v1322
        %1326 = vmatprep.subr.bf16.mxu0 0
        %1327 = vmatpush1.bf16.xpose.msra.mxu0 0
        %1328 = vmatprep.subr.bf16.mxu0 0
        %1329 = vmatpush1.bf16.xpose.msra.mxu0 0
        %1330 = vmatprep.subr.bf16.mxu0 0
        %1331 = vmatpush1.bf16.xpose.msra.mxu0 0
        %1332 = vmatprep.subr.bf16.mxu0 0
        %1333 = vmatpush1.bf16.xpose.msra.mxu0 0
        %1334 = vmatprep.subr.bf16.mxu0 0
        %1335 = vmatpush1.bf16.xpose.msra.mxu0 0
        %1336 = vmatprep.subr.bf16.mxu0 0
        %1337 = vmatpush1.bf16.xpose.msra.mxu0 0
        %1338 = vmatprep.subr.bf16.mxu0 0
        %1339 = vmatpush1.bf16.xpose.msra.mxu0 0
        %1340 = vmatprep.subr.bf16.mxu0 0
        %1341 = vmatpush1.bf16.xpose.msra.mxu0 0
        %1342 = vmatprep.subr.bf16.mxu0 0
        %1343 = vmatpush1.bf16.xpose.msra.mxu0 0
        %1344 = vmatprep.subr.bf16.mxu0 0
        %1345 = vmatpush1.bf16.xpose.msra.mxu0 0
        %1346 = vmatprep.subr.bf16.mxu0 0
        %1347 = vmatpush1.bf16.xpose.msra.mxu0 0
        %1348 = vmatprep.subr.bf16.mxu0 0
        %1349 = vmatpush1.bf16.xpose.msra.mxu0 0
        %1350 = vmatprep.subr.bf16.mxu0 0
        %1351 = vmatpush1.bf16.xpose.msra.mxu0 0
        %1352 = vmatprep.subr.bf16.mxu0 0
        %1353 = vmatpush1.bf16.xpose.msra.mxu0 0
        %1354 = vmatprep.subr.bf16.mxu0 0
        %1355 = vmatpush1.bf16.xpose.msra.mxu0 0
        %1356 = vmatprep.mubr.bf16.mxu0 0
        %1357 = vmatmul.mubr.bf16.gmra.mrb[0].mxu0 %v1319
        %v1358 = vpop.f32.mrb[0].mxu0
        %v1359 = vadd.f32 0.0, %v1358
        %v1360 = vpop.f32.mrb[0].mxu0
        %v1361 = vpop.f32.mrb[0].mxu0
        %v1362 = vpop.f32.mrb[0].mxu0
        %1363 = vdwg.mxu0
        %v1365 = vsel %vm1317, %v1314, 0
        %v1368 = vsel %vm1317, %v1316, 0
        %1370 = vmatprep.subr.bf16.mxu0 0
        %1371 = vmatpush1.bf16.xpose.msra.mxu0 %v1368
        %1372 = vmatprep.subr.bf16.mxu0 0
        %1373 = vmatpush1.bf16.xpose.msra.mxu0 0
        %1374 = vmatprep.subr.bf16.mxu0 0
        %1375 = vmatpush1.bf16.xpose.msra.mxu0 0
        %1376 = vmatprep.subr.bf16.mxu0 0
        %1377 = vmatpush1.bf16.xpose.msra.mxu0 0
        %1378 = vmatprep.subr.bf16.mxu0 0
        %1379 = vmatpush1.bf16.xpose.msra.mxu0 0
        %1380 = vmatprep.subr.bf16.mxu0 0
        %1381 = vmatpush1.bf16.xpose.msra.mxu0 0
        %1382 = vmatprep.subr.bf16.mxu0 0
        %1383 = vmatpush1.bf16.xpose.msra.mxu0 0
        %1384 = vmatprep.subr.bf16.mxu0 0
        %1385 = vmatpush1.bf16.xpose.msra.mxu0 0
        %1386 = vmatprep.subr.bf16.mxu0 0
        %1387 = vmatpush1.bf16.xpose.msra.mxu0 0
        %1388 = vmatprep.subr.bf16.mxu0 0
        %1389 = vmatpush1.bf16.xpose.msra.mxu0 0
        %1390 = vmatprep.subr.bf16.mxu0 0
        %1391 = vmatpush1.bf16.xpose.msra.mxu0 0
        %1392 = vmatprep.subr.bf16.mxu0 0
        %1393 = vmatpush1.bf16.xpose.msra.mxu0 0
        %1394 = vmatprep.subr.bf16.mxu0 0
        %1395 = vmatpush1.bf16.xpose.msra.mxu0 0
        %1396 = vmatprep.subr.bf16.mxu0 0
        %1397 = vmatpush1.bf16.xpose.msra.mxu0 0
        %1398 = vmatprep.subr.bf16.mxu0 0
        %1399 = vmatpush1.bf16.xpose.msra.mxu0 0
        %1400 = vmatprep.subr.bf16.mxu0 0
        %1401 = vmatpush1.bf16.xpose.msra.mxu0 0
        %1402 = vmatprep.mubr.bf16.mxu0 0
        %1403 = vmatmul.mubr.bf16.gmra.mrb[0].mxu0 %v1365
        %v1404 = vpop.f32.mrb[0].mxu0
        %v1405 = vadd.f32 0.0, %v1404
        %v1406 = vpop.f32.mrb[0].mxu0
        %v1407 = vpop.f32.mrb[0].mxu0
        %v1408 = vpop.f32.mrb[0].mxu0
        %1409 = vdwg.mxu0
        %v1410 = vmul.f32 %v1359, 0.17677669
        %v1411 = vmul.f32 %v1405, 0.17677669
        %vm1412 = vcmask 64512
        %v1413 = vsel %vm1412, %v1410, -inf
        %1414 = vmax.xlane.f32.xlu0 %v1413
        %v1415 = vpop.xlane.xlu0 %1414
        %v1416 = vsel %vm1412, %v1411, -inf
        %1417 = vmax.xlane.f32.xlu0 %v1416
        %v1418 = vpop.xlane.xlu0 %1417
        %v1419 = vsub.f32 %v1410, %v1415
        %v1420 = vsub.f32 %v1411, %v1418
        %v1421 = vmul.f32 %v1419, 1.442695
        %v1422 = vpow.pop %v1421
        %v1423 = vmul.f32 %v1420, 1.442695
        %v1424 = vpow.pop %v1423
        %v1425 = vsel %vm1412, %v1422, 0.0
        %1426 = vadd.xlane.f32.xlu0 %v1425
        %v1427 = vpop.xlane.xlu0 %1426
        %v1428 = vsel %vm1412, %v1424, 0.0
        %1429 = vadd.xlane.f32.xlu0 %v1428
        %v1430 = vpop.xlane.xlu0 %1429
        %v1431 = vrcp.pop %v1427
        %v1432 = vrcp.pop %v1430
        %v1433 = vmul.f32 %v1422, %v1431
        %v1434 = vmul.f32 %v1424, %v1432
        %v1435 = vpack.c.bf16 %v1433, %v1433
        %v1436 = vpack.c.bf16 %v1434, %v1434
        %v1437 = vpack.c.bf16 %v1244, %v1244
        %v1438 = vpack.c.bf16 %v1308, %v1308
        %v1440 = vsel %vm1412, %v1435, 0
        %vm1442 = vcmask 1043456
        %v1444 = vsel %vm1442, %v1437, 0
        %1446 = vmatprep.subr.bf16.mxu0 0
        %1447 = vmatpush1.bf16.msra.mxu0 %v1444
        %1448 = vmatprep.subr.bf16.mxu0 0
        %1449 = vmatpush1.bf16.msra.mxu0 0
        %1450 = vmatprep.subr.bf16.mxu0 0
        %1451 = vmatpush1.bf16.msra.mxu0 0
        %1452 = vmatprep.subr.bf16.mxu0 0
        %1453 = vmatpush1.bf16.msra.mxu0 0
        %1454 = vmatprep.subr.bf16.mxu0 0
        %1455 = vmatpush1.bf16.msra.mxu0 0
        %1456 = vmatprep.subr.bf16.mxu0 0
        %1457 = vmatpush1.bf16.msra.mxu0 0
        %1458 = vmatprep.subr.bf16.mxu0 0
        %1459 = vmatpush1.bf16.msra.mxu0 0
        %1460 = vmatprep.subr.bf16.mxu0 0
        %1461 = vmatpush1.bf16.msra.mxu0 0
        %1462 = vmatprep.subr.bf16.mxu0 0
        %1463 = vmatpush1.bf16.msra.mxu0 0
        %1464 = vmatprep.subr.bf16.mxu0 0
        %1465 = vmatpush1.bf16.msra.mxu0 0
        %1466 = vmatprep.subr.bf16.mxu0 0
        %1467 = vmatpush1.bf16.msra.mxu0 0
        %1468 = vmatprep.subr.bf16.mxu0 0
        %1469 = vmatpush1.bf16.msra.mxu0 0
        %1470 = vmatprep.subr.bf16.mxu0 0
        %1471 = vmatpush1.bf16.msra.mxu0 0
        %1472 = vmatprep.subr.bf16.mxu0 0
        %1473 = vmatpush1.bf16.msra.mxu0 0
        %1474 = vmatprep.subr.bf16.mxu0 0
        %1475 = vmatpush1.bf16.msra.mxu0 0
        %1476 = vmatprep.subr.bf16.mxu0 0
        %1477 = vmatpush1.bf16.msra.mxu0 0
        %1478 = vmatprep.mubr.bf16.mxu0 0
        %1479 = vmatmul.mubr.bf16.gmra.mrb[0].mxu0 %v1440
        %v1480 = vpop.f32.mrb[0].mxu0
        %v1481 = vadd.f32 0.0, %v1480
        %v1482 = vpop.f32.mrb[0].mxu0
        %v1483 = vpop.f32.mrb[0].mxu0
        %v1484 = vpop.f32.mrb[0].mxu0
        %1485 = vdwg.mxu0
        %v1487 = vsel %vm1412, %v1436, 0
        %v1490 = vsel %vm1442, %v1438, 0
        %1492 = vmatprep.subr.bf16.mxu0 0
        %1493 = vmatpush1.bf16.msra.mxu0 %v1490
        %1494 = vmatprep.subr.bf16.mxu0 0
        %1495 = vmatpush1.bf16.msra.mxu0 0
        %1496 = vmatprep.subr.bf16.mxu0 0
        %1497 = vmatpush1.bf16.msra.mxu0 0
        %1498 = vmatprep.subr.bf16.mxu0 0
        %1499 = vmatpush1.bf16.msra.mxu0 0
        %1500 = vmatprep.subr.bf16.mxu0 0
        %1501 = vmatpush1.bf16.msra.mxu0 0
        %1502 = vmatprep.subr.bf16.mxu0 0
        %1503 = vmatpush1.bf16.msra.mxu0 0
        %1504 = vmatprep.subr.bf16.mxu0 0
        %1505 = vmatpush1.bf16.msra.mxu0 0
        %1506 = vmatprep.subr.bf16.mxu0 0
        %1507 = vmatpush1.bf16.msra.mxu0 0
        %1508 = vmatprep.subr.bf16.mxu0 0
        %1509 = vmatpush1.bf16.msra.mxu0 0
        %1510 = vmatprep.subr.bf16.mxu0 0
        %1511 = vmatpush1.bf16.msra.mxu0 0
        %1512 = vmatprep.subr.bf16.mxu0 0
        %1513 = vmatpush1.bf16.msra.mxu0 0
        %1514 = vmatprep.subr.bf16.mxu0 0
        %1515 = vmatpush1.bf16.msra.mxu0 0
        %1516 = vmatprep.subr.bf16.mxu0 0
        %1517 = vmatpush1.bf16.msra.mxu0 0
        %1518 = vmatprep.subr.bf16.mxu0 0
        %1519 = vmatpush1.bf16.msra.mxu0 0
        %1520 = vmatprep.subr.bf16.mxu0 0
        %1521 = vmatpush1.bf16.msra.mxu0 0
        %1522 = vmatprep.subr.bf16.mxu0 0
        %1523 = vmatpush1.bf16.msra.mxu0 0
        %1524 = vmatprep.mubr.bf16.mxu0 0
        %1525 = vmatmul.mubr.bf16.gmra.mrb[0].mxu0 %v1487
        %v1526 = vpop.f32.mrb[0].mxu0
        %v1527 = vadd.f32 0.0, %v1526
        %v1528 = vpop.f32.mrb[0].mxu0
        %v1529 = vpop.f32.mrb[0].mxu0
        %v1530 = vpop.f32.mrb[0].mxu0
        %1531 = vdwg.mxu0
        %v1532 = vld [vmem:[%s793] sm:$0xf]
        %v1533 = vld [vmem:[%s793 + $0x4] sm:$0xf]
        %v1534 = vld [vmem:[%s793 + $0x8] sm:$0xf]
        %v1535 = vld [vmem:[%s793 + $0xc] sm:$0xf]
        %v1536 = vld [vmem:[%s793 + $0x10] sm:$0xf]
        %v1537 = vld [vmem:[%s793 + $0x14] sm:$0xf]
        %v1538 = vld [vmem:[%s793 + $0x18] sm:$0xf]
        %v1539 = vld [vmem:[%s793 + $0x1c] sm:$0xf]
        %v1540 = vpack.c.bf16 %v1481, %v1481
        %v1541 = vpack.c.bf16 %v1527, %v1527
        %v1546 = vunpack.c.l.b16 %v1532
        %v1547 = vunpack.c.l.b16 %v1533
        %v1548 = vunpack.c.l.b16 %v1534
        %v1549 = vunpack.c.l.b16 %v1535
        %v1550 = vpack.c.b16 %v1547, %v1546
        %v1551 = vpack.c.b16 %v1549, %v1548
        %v1555 = vsel %vm1317, %v1540, 0
        %1557 = vmatprep.subr.bf16.mxu0 0
        %1558 = vmatpush1.bf16.msra.mxu0 %v1550
        %1559 = vmatprep.subr.bf16.mxu0 0
        %1560 = vmatpush1.bf16.msra.mxu0 %v1551
        %1561 = vmatprep.subr.bf16.mxu0 0
        %1562 = vmatpush1.bf16.msra.mxu0 0
        %1563 = vmatprep.subr.bf16.mxu0 0
        %1564 = vmatpush1.bf16.msra.mxu0 0
        %1565 = vmatprep.subr.bf16.mxu0 0
        %1566 = vmatpush1.bf16.msra.mxu0 0
        %1567 = vmatprep.subr.bf16.mxu0 0
        %1568 = vmatpush1.bf16.msra.mxu0 0
        %1569 = vmatprep.subr.bf16.mxu0 0
        %1570 = vmatpush1.bf16.msra.mxu0 0
        %1571 = vmatprep.subr.bf16.mxu0 0
        %1572 = vmatpush1.bf16.msra.mxu0 0
        %1573 = vmatprep.subr.bf16.mxu0 0
        %1574 = vmatpush1.bf16.msra.mxu0 0
        %1575 = vmatprep.subr.bf16.mxu0 0
        %1576 = vmatpush1.bf16.msra.mxu0 0
        %1577 = vmatprep.subr.bf16.mxu0 0
        %1578 = vmatpush1.bf16.msra.mxu0 0
        %1579 = vmatprep.subr.bf16.mxu0 0
        %1580 = vmatpush1.bf16.msra.mxu0 0
        %1581 = vmatprep.subr.bf16.mxu0 0
        %1582 = vmatpush1.bf16.msra.mxu0 0
        %1583 = vmatprep.subr.bf16.mxu0 0
        %1584 = vmatpush1.bf16.msra.mxu0 0
        %1585 = vmatprep.subr.bf16.mxu0 0
        %1586 = vmatpush1.bf16.msra.mxu0 0
        %1587 = vmatprep.subr.bf16.mxu0 0
        %1588 = vmatpush1.bf16.msra.mxu0 0
        %1589 = vmatprep.mubr.bf16.mxu0 0
        %1590 = vmatmul.mubr.bf16.gmra.mrb[0].mxu0 %v1555
        %v1591 = vpop.f32.mrb[0].mxu0
        %v1592 = vadd.f32 0.0, %v1591
        %v1593 = vpop.f32.mrb[0].mxu0
        %v1594 = vpop.f32.mrb[0].mxu0
        %v1595 = vpop.f32.mrb[0].mxu0
        %1596 = vdwg.mxu0
        %v1601 = vunpack.c.l.b16 %v1536
        %v1602 = vunpack.c.l.b16 %v1537
        %v1603 = vunpack.c.l.b16 %v1538
        %v1604 = vunpack.c.l.b16 %v1539
        %v1605 = vpack.c.b16 %v1602, %v1601
        %v1606 = vpack.c.b16 %v1604, %v1603
        %v1610 = vsel %vm1317, %v1541, 0
        %1612 = vmatprep.subr.bf16.mxu0 0
        %1613 = vmatpush1.bf16.msra.mxu0 %v1605
        %1614 = vmatprep.subr.bf16.mxu0 0
        %1615 = vmatpush1.bf16.msra.mxu0 %v1606
        %1616 = vmatprep.subr.bf16.mxu0 0
        %1617 = vmatpush1.bf16.msra.mxu0 0
        %1618 = vmatprep.subr.bf16.mxu0 0
        %1619 = vmatpush1.bf16.msra.mxu0 0
        %1620 = vmatprep.subr.bf16.mxu0 0
        %1621 = vmatpush1.bf16.msra.mxu0 0
        %1622 = vmatprep.subr.bf16.mxu0 0
        %1623 = vmatpush1.bf16.msra.mxu0 0
        %1624 = vmatprep.subr.bf16.mxu0 0
        %1625 = vmatpush1.bf16.msra.mxu0 0
        %1626 = vmatprep.subr.bf16.mxu0 0
        %1627 = vmatpush1.bf16.msra.mxu0 0
        %1628 = vmatprep.subr.bf16.mxu0 0
        %1629 = vmatpush1.bf16.msra.mxu0 0
        %1630 = vmatprep.subr.bf16.mxu0 0
        %1631 = vmatpush1.bf16.msra.mxu0 0
        %1632 = vmatprep.subr.bf16.mxu0 0
        %1633 = vmatpush1.bf16.msra.mxu0 0
        %1634 = vmatprep.subr.bf16.mxu0 0
        %1635 = vmatpush1.bf16.msra.mxu0 0
        %1636 = vmatprep.subr.bf16.mxu0 0
        %1637 = vmatpush1.bf16.msra.mxu0 0
        %1638 = vmatprep.subr.bf16.mxu0 0
        %1639 = vmatpush1.bf16.msra.mxu0 0
        %1640 = vmatprep.subr.bf16.mxu0 0
        %1641 = vmatpush1.bf16.msra.mxu0 0
        %1642 = vmatprep.subr.bf16.mxu0 0
        %1643 = vmatpush1.bf16.msra.mxu0 0
        %1644 = vmatprep.mubr.bf16.mxu0 0
        %1645 = vmatmul.mubr.bf16.gmra.mrb[0].mxu0 %v1610
        %v1646 = vpop.f32.mrb[0].mxu0
        %v1647 = vadd.f32 0.0, %v1646
        %v1648 = vpop.f32.mrb[0].mxu0
        %v1649 = vpop.f32.mrb[0].mxu0
        %v1650 = vpop.f32.mrb[0].mxu0
        %1651 = vdwg.mxu0
        %v1652 = vsel %vm889, %v1592, 0.0
        %v1653 = vsel %vm889, %v1647, 0.0
        %v1654 = vadd.f32 %v1652, %v1653
        %v1655 = vld [vmem:[%s796] sm:$0x1]
        %v1657 = vlaneseq
        %v1658 = vshrl.u32 %v1657, 7
        %v1659 = vsub.s32 0, %v1658
        %v1660 = vrot.slane %v1655, %v1659
        %v1662 = vadd.f32 %v1654, %v1660
        %v1663 = vadd.f32 %v833, %v1662
        %v1664 = vld [vmem:[%s799] sm:$0x1]
        %v1665 = vld [vmem:[%s802] sm:$0x1]
        %v1666 = vsel %vm889, %v1663, 0.0
        %1667 = vadd.xlane.f32.xlu0 %v1666
        %v1668 = vpop.xlane.xlu0 %1667
        %v1669 = vrcp.pop 64.0
        %v1670 = vmul.f32 %v1668, %v1669
        %v1671 = vsub.f32 %v1663, %v1670
        %v1672 = vmul.f32 %v1671, %v1671
        %v1673 = vsel %vm889, %v1672, 0.0
        %1674 = vadd.xlane.f32.xlu0 %v1673
        %v1675 = vpop.xlane.xlu0 %1674
        %v1676 = vmul.f32 %v1675, %v1669
        %v1677 = vadd.f32 %v1676, 1e-05
        %v1678 = vrsqrt.pop %v1677
        %v1679 = vmul.f32 %v1671, %v1678
        %v1681 = vlaneseq
        %v1682 = vshrl.u32 %v1681, 7
        %v1683 = vsub.s32 0, %v1682
        %v1684 = vrot.slane %v1664, %v1683
        %v1686 = vmul.f32 %v1679, %v1684
        %v1688 = vlaneseq
        %v1689 = vshrl.u32 %v1688, 7
        %v1690 = vsub.s32 0, %v1689
        %v1691 = vrot.slane %v1665, %v1690
        %v1693 = vadd.f32 %v1686, %v1691
        %v1694 = vpack.c.bf16 %v1693, %v1693
        %v1695 = vld [vmem:[%s807] sm:$0xf]
        %v1696 = vld [vmem:[%s807 + $0x4] sm:$0xf]
        %v1697 = vld [vmem:[%s807 + $0x8] sm:$0xf]
        %v1698 = vld [vmem:[%s807 + $0xc] sm:$0xf]
        %v1699 = vld [vmem:[%s807 + $0x10] sm:$0xf]
        %v1700 = vld [vmem:[%s807 + $0x14] sm:$0xf]
        %v1701 = vld [vmem:[%s807 + $0x18] sm:$0xf]
        %v1702 = vld [vmem:[%s807 + $0x1c] sm:$0xf]
        %v1703 = vld [vmem:[%s810] sm:$0x1]
        %v1705 = vlaneseq
        %v1706 = vshrl.u32 %v1705, 7
        %v1707 = vsub.s32 0, %v1706
        %v1708 = vrot.slane %v1703, %v1707
        %v1718 = vunpack.c.l.b16 %v1695
        %v1719 = vunpack.c.l.b16 %v1696
        %v1720 = vunpack.c.l.b16 %v1697
        %v1721 = vunpack.c.l.b16 %v1698
        %v1722 = vunpack.c.l.b16 %v1699
        %v1723 = vunpack.c.l.b16 %v1700
        %v1724 = vunpack.c.l.b16 %v1701
        %v1725 = vunpack.c.l.b16 %v1702
        %v1726 = vpack.c.b16 %v1719, %v1718
        %v1727 = vpack.c.b16 %v1721, %v1720
        %v1728 = vpack.c.b16 %v1723, %v1722
        %v1729 = vpack.c.b16 %v1725, %v1724
        %v1735 = vsel %vm889, %v1694, 0
        %1737 = vmatprep.subr.bf16.mxu0 0
        %1738 = vmatpush1.bf16.msra.mxu0 %v1726
        %1739 = vmatprep.subr.bf16.mxu0 0
        %1740 = vmatpush1.bf16.msra.mxu0 %v1727
        %1741 = vmatprep.subr.bf16.mxu0 0
        %1742 = vmatpush1.bf16.msra.mxu0 %v1728
        %1743 = vmatprep.subr.bf16.mxu0 0
        %1744 = vmatpush1.bf16.msra.mxu0 %v1729
        %1745 = vmatprep.subr.bf16.mxu0 0
        %1746 = vmatpush1.bf16.msra.mxu0 0
        %1747 = vmatprep.subr.bf16.mxu0 0
        %1748 = vmatpush1.bf16.msra.mxu0 0
        %1749 = vmatprep.subr.bf16.mxu0 0
        %1750 = vmatpush1.bf16.msra.mxu0 0
        %1751 = vmatprep.subr.bf16.mxu0 0
        %1752 = vmatpush1.bf16.msra.mxu0 0
        %1753 = vmatprep.subr.bf16.mxu0 0
        %1754 = vmatpush1.bf16.msra.mxu0 0
        %1755 = vmatprep.subr.bf16.mxu0 0
        %1756 = vmatpush1.bf16.msra.mxu0 0
        %1757 = vmatprep.subr.bf16.mxu0 0
        %1758 = vmatpush1.bf16.msra.mxu0 0
        %1759 = vmatprep.subr.bf16.mxu0 0
        %1760 = vmatpush1.bf16.msra.mxu0 0
        %1761 = vmatprep.subr.bf16.mxu0 0
        %1762 = vmatpush1.bf16.msra.mxu0 0
        %1763 = vmatprep.subr.bf16.mxu0 0
        %1764 = vmatpush1.bf16.msra.mxu0 0
        %1765 = vmatprep.subr.bf16.mxu0 0
        %1766 = vmatpush1.bf16.msra.mxu0 0
        %1767 = vmatprep.subr.bf16.mxu0 0
        %1768 = vmatpush1.bf16.msra.mxu0 0
        %1769 = vmatprep.mubr.bf16.mxu0 0
        %1770 = vmatmul.mubr.bf16.gmra.mrb[0].mxu0 %v1735
        %v1771 = vpop.f32.mrb[0].mxu0
        %v1772 = vadd.f32 %v1708, %v1771
        %v1773 = vpop.f32.mrb[0].mxu0
        %v1774 = vpop.f32.mrb[0].mxu0
        %v1775 = vpop.f32.mrb[0].mxu0
        %1776 = vdwg.mxu0
        %v1777 = vxor.u32 %v1772, 2147483648
        %v1778 = vmul.f32 %v1777, 1.442695
        %v1779 = vpow.pop %v1778
        %v1780 = vadd.f32 %v1779, 1.0
        %v1781 = vrcp.pop %v1780
        %v1782 = vmul.f32 1.0, %v1781
        %v1783 = vmul.f32 %v1772, %v1782
        %v1784 = vpack.c.bf16 %v1783, %v1783
        %v1785 = vld [vmem:[%s815] sm:$0xf]
        %v1786 = vld [vmem:[%s815 + $0x4] sm:$0xf]
        %v1787 = vld [vmem:[%s815 + $0x8] sm:$0xf]
        %v1788 = vld [vmem:[%s815 + $0xc] sm:$0xf]
        %v1789 = vld [vmem:[%s815 + $0x10] sm:$0xf]
        %v1790 = vld [vmem:[%s815 + $0x14] sm:$0xf]
        %v1791 = vld [vmem:[%s815 + $0x18] sm:$0xf]
        %v1792 = vld [vmem:[%s815 + $0x1c] sm:$0xf]
        %v1793 = vld [vmem:[%s815 + $0x20] sm:$0xf]
        %v1794 = vld [vmem:[%s815 + $0x24] sm:$0xf]
        %v1795 = vld [vmem:[%s815 + $0x28] sm:$0xf]
        %v1796 = vld [vmem:[%s815 + $0x2c] sm:$0xf]
        %v1797 = vld [vmem:[%s815 + $0x30] sm:$0xf]
        %v1798 = vld [vmem:[%s815 + $0x34] sm:$0xf]
        %v1799 = vld [vmem:[%s815 + $0x38] sm:$0xf]
        %v1800 = vld [vmem:[%s815 + $0x3c] sm:$0xf]
        %v1801 = vld [vmem:[%s818] sm:$0x1]
        %v1803 = vlaneseq
        %v1804 = vshrl.u32 %v1803, 7
        %v1805 = vsub.s32 0, %v1804
        %v1806 = vrot.slane %v1801, %v1805
        %v1824 = vunpack.c.l.b16 %v1785
        %v1825 = vunpack.c.l.b16 %v1786
        %v1826 = vunpack.c.l.b16 %v1787
        %v1827 = vunpack.c.l.b16 %v1788
        %v1828 = vunpack.c.l.b16 %v1789
        %v1829 = vunpack.c.l.b16 %v1790
        %v1830 = vunpack.c.l.b16 %v1791
        %v1831 = vunpack.c.l.b16 %v1792
        %v1832 = vunpack.c.l.b16 %v1793
        %v1833 = vunpack.c.l.b16 %v1794
        %v1834 = vunpack.c.l.b16 %v1795
        %v1835 = vunpack.c.l.b16 %v1796
        %v1836 = vunpack.c.l.b16 %v1797
        %v1837 = vunpack.c.l.b16 %v1798
        %v1838 = vunpack.c.l.b16 %v1799
        %v1839 = vunpack.c.l.b16 %v1800
        %v1840 = vpack.c.b16 %v1825, %v1824
        %v1841 = vpack.c.b16 %v1827, %v1826
        %v1842 = vpack.c.b16 %v1829, %v1828
        %v1843 = vpack.c.b16 %v1831, %v1830
        %v1844 = vpack.c.b16 %v1833, %v1832
        %v1845 = vpack.c.b16 %v1835, %v1834
        %v1846 = vpack.c.b16 %v1837, %v1836
        %v1847 = vpack.c.b16 %v1839, %v1838
        %1856 = vmatprep.subr.bf16.mxu0 0
        %1857 = vmatpush1.bf16.msra.mxu0 %v1840
        %1858 = vmatprep.subr.bf16.mxu0 0
        %1859 = vmatpush1.bf16.msra.mxu0 %v1841
        %1860 = vmatprep.subr.bf16.mxu0 0
        %1861 = vmatpush1.bf16.msra.mxu0 %v1842
        %1862 = vmatprep.subr.bf16.mxu0 0
        %1863 = vmatpush1.bf16.msra.mxu0 %v1843
        %1864 = vmatprep.subr.bf16.mxu0 0
        %1865 = vmatpush1.bf16.msra.mxu0 %v1844
        %1866 = vmatprep.subr.bf16.mxu0 0
        %1867 = vmatpush1.bf16.msra.mxu0 %v1845
        %1868 = vmatprep.subr.bf16.mxu0 0
        %1869 = vmatpush1.bf16.msra.mxu0 %v1846
        %1870 = vmatprep.subr.bf16.mxu0 0
        %1871 = vmatpush1.bf16.msra.mxu0 %v1847
        %1872 = vmatprep.subr.bf16.mxu0 0
        %1873 = vmatpush1.bf16.msra.mxu0 0
        %1874 = vmatprep.subr.bf16.mxu0 0
        %1875 = vmatpush1.bf16.msra.mxu0 0
        %1876 = vmatprep.subr.bf16.mxu0 0
        %1877 = vmatpush1.bf16.msra.mxu0 0
        %1878 = vmatprep.subr.bf16.mxu0 0
        %1879 = vmatpush1.bf16.msra.mxu0 0
        %1880 = vmatprep.subr.bf16.mxu0 0
        %1881 = vmatpush1.bf16.msra.mxu0 0
        %1882 = vmatprep.subr.bf16.mxu0 0
        %1883 = vmatpush1.bf16.msra.mxu0 0
        %1884 = vmatprep.subr.bf16.mxu0 0
        %1885 = vmatpush1.bf16.msra.mxu0 0
        %1886 = vmatprep.subr.bf16.mxu0 0
        %1887 = vmatpush1.bf16.msra.mxu0 0
        %1888 = vmatprep.mubr.bf16.mxu0 0
        %1889 = vmatmul.mubr.bf16.gmra.mrb[0].mxu0 %v1784
        %v1890 = vpop.f32.mrb[0].mxu0
        %v1891 = vadd.f32 %v1806, %v1890
        %v1892 = vpop.f32.mrb[0].mxu0
        %v1893 = vpop.f32.mrb[0].mxu0
        %v1894 = vpop.f32.mrb[0].mxu0
        %1895 = vdwg.mxu0
        %v1896 = vadd.f32 %v1693, %v1891
        %v1897 = vld [vmem:[%s821] sm:$0x1]
        %v1898 = vld [vmem:[%s824] sm:$0x1]
        %v1899 = vsel %vm889, %v1896, 0.0
        %1900 = vadd.xlane.f32.xlu0 %v1899
        %v1901 = vpop.xlane.xlu0 %1900
        %v1902 = vmul.f32 %v1901, %v1669
        %v1903 = vsub.f32 %v1896, %v1902
        %v1904 = vmul.f32 %v1903, %v1903
        %v1905 = vsel %vm889, %v1904, 0.0
        %1906 = vadd.xlane.f32.xlu0 %v1905
        %v1907 = vpop.xlane.xlu0 %1906
        %v1908 = vmul.f32 %v1907, %v1669
        %v1909 = vadd.f32 %v1908, 1e-05
        %v1910 = vrsqrt.pop %v1909
        %v1911 = vmul.f32 %v1903, %v1910
        %v1913 = vlaneseq
        %v1914 = vshrl.u32 %v1913, 7
        %v1915 = vsub.s32 0, %v1914
        %v1916 = vrot.slane %v1897, %v1915
        %v1918 = vmul.f32 %v1911, %v1916
        %v1920 = vlaneseq
        %v1921 = vshrl.u32 %v1920, 7
        %v1922 = vsub.s32 0, %v1921
        %v1923 = vrot.slane %v1898, %v1922
        %v1925 = vadd.f32 %v1918, %v1923
        %1926 = vst.msk [vmem:[#allocation2] sm:$0xff] %vm889, %v1925
        %p1927 = scmp.eq.s32.totalorder %s36, 1
        // Predicated region
        $region93: #{tpu_custom_call.1} parent=87 // pred_check
          %p1928 = pneg %p1927
        $region94: #{tpu_custom_call.1} parent=87 // pred_check_branch
          %1930 = sbr.rel (%p1928) target = $region96
        $region95: #{tpu_custom_call.1} parent=87 // pred_region
          %1931 = vst.msk [vmem:[%s757] sm:$0xff] %vm889, %v1925
        $region96: #{tpu_custom_call.1} parent=87 // pred_fallthru
          _
        %s1932 = sand.u32 %s493, 1
        %s1933 = scalar_lea.sflag [#allocation4], %s1932
        %s1934 = sand.u32 %s493, 1
        %s1935 = smul.addr %s1934, 8
        %s1936 = scalar_lea.vmem [#allocation3], %s1935
        // Predicated region
        $region97: #{tpu_custom_call.1} parent=87 // pred_check
          %p1937 = pneg %p503
        $region98: #{tpu_custom_call.1} parent=87 // pred_check_branch
          %1939 = sbr.rel (%p1937) target = $region100
        $region99: #{tpu_custom_call.1} parent=87 // pred_region
          %s1941 = ssub.s32 128, 128
          %1942 = vsyncadd %s1933, %s1941
          %s1943 = smul.addr %s35, 128
          %s1944 = scalar_lea.hbm %s17, %s1943
          %s1946 = sshll.u32 %s1936, 4
          %s1947 = int_to_ptr.vmem [resolvable:$true] %s1946
          %1949 = dma.vmem_to_hbm [thread:$0]  %s1947, 128, %s1944, %s1933
        $region100: #{tpu_custom_call.1} parent=87 // pred_fallthru
          _
      $region88: #{tpu_custom_call.1} parent=5 // pred_fallthru
        _
      %p1950 = scmp.le.s32.totalorder 2, %s26
      // Predicated region
      $region101: #{tpu_custom_call.1} parent=5 // pred_check
        %p1951 = pneg %p1950
      $region102: #{tpu_custom_call.1} parent=5 // pred_check_branch
        %1953 = sbr.rel (%p1951) target = $region104
      $region103: #{tpu_custom_call.1} parent=5 // pred_region
        %s1954 = ssub.s32 %s26, 2
        // Predicated region
        $region105: #{tpu_custom_call.1} parent=103 // pred_check
          %p1955 = pneg %p509
        $region106: #{tpu_custom_call.1} parent=103 // pred_check_branch
          %1957 = sbr.rel (%p1955) target = $region108
        $region107: #{tpu_custom_call.1} parent=103 // pred_region
          %s1958 = sand.u32 %s494, 1
          %s1959 = scalar_lea.sflag [#allocation4], %s1958
          %s1960 = sand.u32 %s494, 1
          %s1961 = smul.addr %s1960, 8
          %s1962 = scalar_lea.vmem [#allocation3], %s1961
          %1963 = dma.done %s1959, 128
        $region108: #{tpu_custom_call.1} parent=103 // pred_fallthru
          _
      $region104: #{tpu_custom_call.1} parent=5 // pred_fallthru
        _
    $region6: #{tpu_custom_call.1} parent=1 // loop_footer
      %s30 = sadd.s32 1, %s26
    $region7: #{tpu_custom_call.1} parent=1 // loop_footer_branch
      %25 = sbr.rel target = $region3
    $region8: #{tpu_custom_call.1} parent=1 // loop_exit
      _
    %1964 = vsyncpa [#allocation4], 1
    %s1965 = scalar_lea.sflag [#allocation4], 1
    %1966 = vsyncpa %s1965, 1

</llo_original>
